<compile_context>
chip_gen: v7x
topology: tpu7x:2x2x1
jax: 0.10.0
libtpu: 0.0.40
codegen_flags: <defaults>
</compile_context>

<pallas_src>
import functools
import math
import random

import numpy as np

import jax
import jax.numpy as jnp
from jax import lax
from jax.experimental import pallas as pl
from jax.experimental.pallas import tpu as pltpu


# ----------------------------- host-side helpers -----------------------------

def _gaussian_1d_erf(sigma, truncated=4.0):
    """MONAI gaussian_1d(sigma, truncated=4.0, approx='erf') as python floats."""
    tail = int(max(float(sigma) * truncated, 0.5) + 0.5)
    t = 0.70710678 / abs(float(sigma))
    ws = []
    for x in range(-tail, tail + 1):
        w = 0.5 * (math.erf(t * (x + 0.5)) - math.erf(t * (x - 0.5)))
        ws.append(max(w, 0.0))
    return tuple(ws)


def _toeplitz_1d(weights, n):
    """(n, n) matrix T such that (x @ T) == zero-padded 'same' 1-D conv of x."""
    r = (len(weights) - 1) // 2
    T = np.zeros((n, n), np.float32)
    for i in range(n):
        for j in range(max(0, i - r), min(n, i + r + 1)):
            T[i, j] = weights[j - i + r]        # symmetric taps -> symmetric T
    return T


def _kron_hw(weights, h, w):
    """(H*W, H*W) matrix fusing the H- and W-axis 'same' convolutions into one
    matmul on the row-major (h*W + w) folded axis:  Th (x) Tw."""
    return np.kron(_toeplitz_1d(weights, h),
                   _toeplitz_1d(weights, w)).astype(np.float32)


def _zoom_keep_size(x, zoom, method):
    """MONAI Zoom(zoom<1, keep_size=True, padding_mode='constant') on (C,D,H,W)."""
    spatial = x.shape[1:]
    new = tuple(int(math.floor(s * zoom)) for s in spatial)
    y = jax.image.resize(x, (x.shape[0],) + new, method=method)
    pads = [(0, 0)]
    for orig, nw in zip(spatial, new):
        diff = orig - nw
        half = diff // 2
        pads.append((half, diff - half))
    return jnp.pad(y, pads)


def _vmem_budget_bytes():
    """Generation-aware VMEM budget: 75% of per-core capacity (>=25% headroom
    for compiler scratch); falls back to v7x's 64 MiB/TC (smallest of all gens)
    when no TPU is attached."""
    try:
        cap = int(pltpu.get_tpu_info().vmem_capacity_bytes)
    except Exception:
        cap = 64 * 2 ** 20
    return (cap * 3) // 4


def _const_matrix_spec(L, index_map):
    """BlockSpec for a grid-constant weight matrix; request a single pipeline
    buffer (the index_map is constant, so double-buffering is pure VMEM waste)."""
    buffered = getattr(pl, "Buffered", None)
    if buffered is not None:
        try:
            return pl.BlockSpec((L, 2 * L), index_map, pipeline_mode=buffered(1))
        except Exception:
            pass
    return pl.BlockSpec((L, 2 * L), index_map)


# ------------------------------- Pallas kernel --------------------------------

def _hash_uniform_u01(counter, seed_u32, salt):
    """Counter-based hash -> uniform in [0, 1). Pure 32-bit VPU integer ops."""
    x = counter + seed_u32 * jnp.uint32(0x9E3779B9) \
        + jnp.uint32((salt * 0x85EBCA77) & 0xFFFFFFFF)
    x = x ^ (x >> 16)
    x = x * jnp.uint32(0x7FEB352D)
    x = x ^ (x >> 15)
    x = x * jnp.uint32(0x846CA68B)
    x = x ^ (x >> 16)
    return (x >> 8).astype(jnp.int32).astype(jnp.float32) * jnp.float32(1.0 / (1 << 24))


def _approx_normal(shape, seed_u32):
    """Approximate N(0,1): Irwin-Hall sum of 12 hashed uniforms (zero mean,
    unit variance). Works in interpret mode and on all TPU generations.
    TODO(synk): on hardware-only builds, pltpu.prng_seed + prng_random_bits is
    cheaper; it has no interpret/CPU lowering, hence the portable hash here."""
    rows = lax.broadcasted_iota(jnp.uint32, shape, 0)
    cols = lax.broadcasted_iota(jnp.uint32, shape, 1)
    counter = rows * jnp.uint32(shape[1]) + cols
    acc = _hash_uniform_u01(counter, seed_u32, 0)
    for salt in range(1, 12):
        acc = acc + _hash_uniform_u01(counter, seed_u32, salt)
    return acc - jnp.float32(6.0)


def _dconv(x, weights):
    """Zero-padded 'same' 1-D Gaussian taps along the leading/sublane D axis of
    a (C, D, L) tile (exact same-conv operator, matches the Toeplitz H/W form).
    TODO(synk): on hardware, pltpu.roll + an iota boundary mask avoids the
    padded temporary; kept as concat+slice for interpret-mode portability."""
    C, D, L = x.shape
    r = (len(weights) - 1) // 2
    zeros = jnp.zeros((C, r, L), x.dtype)
    xp = jnp.concatenate([zeros, x, zeros], axis=1)
    out = weights[0] * lax.slice_in_dim(xp, 0, D, axis=1)
    for t in range(1, len(weights)):
        out = out + weights[t] * lax.slice_in_dim(xp, t, t + D, axis=1)
    return out


def _augment_kernel(flags_ref, img_ref, kmat_ref, out_ref, *,
                    w1, w2, noise_std, gamma, alpha):
    b = pl.program_id(0)
    _, C, D, L = out_ref.shape

    # Working volume lives in the output VMEM block; the rare branches below
    # update it in place under pl.when (each skipped for ~85% of samples).
    out_ref[...] = img_ref[...]

    # --- RandGaussianNoise(prob=1, mean=0, std=noise_std) ----------------------
    @pl.when(flags_ref[b, 0] == 1)
    def _noise():
        seed = flags_ref[b, 3].astype(jnp.uint32)      # per-sample/per-call seed
        n = _approx_normal((C * D, L), seed).reshape(C, D, L)
        out_ref[0] = out_ref[0] + jnp.float32(noise_std) * n

    # --- GaussianSharpen(sigma1, sigma2, alpha=30) -----------------------------
    #   b1 = gauss1(img); b2 = gauss2(b1); out = (1+alpha)*b1 - alpha*b2
    # The H/W parts of BOTH blurs run as ONE bf16 MXU matmul against the packed
    # (L, 2L) weight [K1 | K1@K2]; the cheap exact D-axis taps stay on the VPU.
    @pl.when(flags_ref[b, 1] == 1)
    def _sharpen():
        x = out_ref[0].reshape(C * D, L).astype(jnp.bfloat16)
        y = jnp.dot(x, kmat_ref[...], preferred_element_type=jnp.float32)
        y1 = y[:, :L].reshape(C, D, L)                 # img * K1_hw
        y12 = y[:, L:].reshape(C, D, L)                # img * (K1_hw @ K2_hw)
        b1 = _dconv(y1, w1)                            # gauss1(img)
        b2 = _dconv(_dconv(y12, w1), w2)               # gauss2(gauss1(img))
        out_ref[0] = (1.0 + alpha) * b1 - alpha * b2

    # --- AdjustContrast(gamma) -------------------------------------------------
    #   ((img - min) / (range + 1e-7)) ** gamma * range + min
    @pl.when(flags_ref[b, 2] == 1)
    def _contrast():
        x = out_ref[0]
        imin = jnp.min(x, keepdims=True)               # whole-volume min (1,1,1)
        rng_ = jnp.max(x, keepdims=True) - imin        # whole-volume range
        base = (x - imin) / (rng_ + 1e-7)              # exact division (reference)
        powed = jnp.where(base > 0.0,
                          jnp.exp(gamma * jnp.log(jnp.maximum(base, 1e-30))),
                          0.0)                         # exact 0**gamma == 0
        out_ref[0] = powed * rng_ + imin


def _pallas_augment(flags, images, kmat, *, w1, w2, noise_std, gamma, alpha=30.0):
    """images: (B, C, D, L=H*W) f32 lane-dense fold;
       flags:  (B, 4) int32 [noise, sharpen, contrast, seed] (host numpy);
       kmat:   (L, 2L) bf16 packed [K1 | K1@K2] kron-Toeplitz H/W blur weight."""
    flags_np = np.asarray(flags, dtype=np.int32)
    B, C, D, L = images.shape
    assert kmat.shape == (L, 2 * L)

    kernel = functools.partial(_augment_kernel, w1=w1, w2=w2,
                               noise_std=float(noise_std), gamma=float(gamma),
                               alpha=float(alpha))
    img_block = pl.BlockSpec((1, C, D, L), lambda b, flags_ref: (b, 0, 0, 0))
    mat_block = _const_matrix_spec(L, lambda b, flags_ref: (0, 0))

    # ---- generation-aware VMEM accounting ----
    vol_bytes = C * D * L * 4
    mat_bytes = int(np.prod(kmat.shape)) * 2            # bf16
    # in + out double-buffered volumes, constant matrix (x2 worst case if the
    # single-buffer request is unavailable), ~8 volume-sized temporaries for
    # the matmul output / blur intermediates / noise field, + slack.
    need = 4 * vol_bytes + 2 * mat_bytes + 8 * vol_bytes + (2 << 20)
    budget = _vmem_budget_bytes()
    if need > budget:
        raise ValueError(
            f"augment kernel needs ~{need >> 20} MiB VMEM but the per-core "
            f"budget is {budget >> 20} MiB; reduce H*W. "
            "TODO(synk): factored separable H/W blur for large volumes.")
    vmem_limit = int(min(max(need, 32 * 2 ** 20), budget))

    # Cost estimate from the *actual* flags (branches are rare, ~15% each).
    n_noise = int(flags_np[:, 0].sum())
    n_sharp = int(flags_np[:, 1].sum())
    n_contr = int(flags_np[:, 2].sum())
    taps = 2 * len(w1) + len(w2)
    cost = pl.CostEstimate(
        flops=int(n_sharp * (2 * C * D * L * 2 * L + 2 * taps * C * D * L)
                  + n_noise * 110 * C * D * L
                  + n_contr * 8 * C * D * L),
        transcendentals=int(n_contr * 2 * C * D * L),
        bytes_accessed=int(2 * B * vol_bytes + mat_bytes),
    )

    return pl.pallas_call(
        kernel,
        out_shape=jax.ShapeDtypeStruct(images.shape, images.dtype),
        grid_spec=pltpu.PrefetchScalarGridSpec(
            num_scalar_prefetch=1,
            grid=(B,),
            in_specs=[img_block, mat_block],
            out_specs=img_block,
        ),
        compiler_params=pltpu.CompilerParams(
            dimension_semantics=("parallel",),
            vmem_limit_bytes=vmem_limit,
        ),
        cost_estimate=cost,
        # TODO(synk): input_output_aliases={1: 0} when the caller can donate the
        # images buffer, to drop the extra HBM output allocation.
    )(jnp.asarray(flags_np), images, kmat)


# ------------------------------- module wrapper --------------------------------

class DataAugmenterJAX:
    """JAX/Pallas port of train.py::DataAugmenter (deterministic RNG, seed=0)."""

    def __init__(self, seed=0):
        random.seed(seed)
        # same draw order as the PyTorch __init__
        self.zoom_rate = random.uniform(0.7, 1.0)
        self.sigma_1 = random.uniform(0.5, 1.5)
        self.sigma_2 = random.uniform(0.5, 1.5)
        self.noise_std = random.uniform(0, 0.33)
        self.gamma = random.uniform(0.65, 1.5)
        self._w1 = _gaussian_1d_erf(self.sigma_1)
        self._w2 = _gaussian_1d_erf(self.sigma_2)
        self._sample_counter = 0      # drives per-sample/per-call noise seeds
        self._kmat_cache = {}

    def _kmat(self, H, W):
        key = (H, W)
        if key not in self._kmat_cache:
            L = H * W
            k1 = _kron_hw(self._w1, H, W)                      # exact same-conv operator
            k12 = (k1 @ _kron_hw(self._w2, H, W)).astype(np.float32)
            packed = np.concatenate([k1, k12], axis=1)         # (L, 2L): [K1 | K1@K2]
            if packed.size * 2 > _vmem_budget_bytes() // 4:
                raise ValueError(
                    f"folded kron-Toeplitz blur matrix too large for VMEM at H*W={L}. "
                    "TODO(synk): factored separable H/W blur (Th/Tw matmuls) for "
                    "large volumes.")
            # bf16: MXU-native on v5e/v6e/v7x and halves the matrix VMEM footprint.
            self._kmat_cache[key] = jnp.asarray(packed, dtype=jnp.bfloat16)
        return self._kmat_cache[key]

    def __call__(self, images, labels):
        # images/labels: (B, 1, C, D, H, W) float32
        B = images.shape[0]
        imgs, lbls = [], []
        flips = np.zeros((B, 3), np.bool_)
        kflags = np.zeros((B, 4), np.int32)
        for b in range(B):
            img = images[b, 0]          # squeeze(0) -> (C, D, H, W)
            lbl = labels[b, 0]
            # per-sample decisions, drawn in the reference order:
            # zoom, flipD, flipH, flipW, noise, sharpen, contrast
            do_zoom = random.random() < 0.15
            flips[b, 0] = random.random() < 0.5
            flips[b, 1] = random.random() < 0.5
            flips[b, 2] = random.random() < 0.5
            kflags[b, 0] = random.random() < 0.15    # noise
            kflags[b, 1] = random.random() < 0.15    # sharpen (blur)
            kflags[b, 2] = random.random() < 0.15    # contrast
            kflags[b, 3] = (1000003 * self._sample_counter + 12345) & 0x7FFFFFFF
            self._sample_counter += 1
            if do_zoom:
                img = _zoom_keep_size(img, self.zoom_rate, "trilinear")
                lbl = _zoom_keep_size(lbl, self.zoom_rate, "nearest")
            imgs.append(img)
            lbls.append(lbl)

        images_g = jnp.stack(imgs)                   # (B, C, D, H, W)
        labels_g = jnp.stack(lbls)

        # Batched flips: one vectorized pass per axis instead of up to 3 tiny
        # full-volume XLA ops per sample.
        for col, ax in enumerate((2, 3, 4)):         # D, H, W axes of (B,C,D,H,W)
            m = jnp.asarray(flips[:, col]).reshape((B, 1, 1, 1, 1))
            images_g = jnp.where(m, jnp.flip(images_g, axis=ax), images_g)
            labels_g = jnp.where(m, jnp.flip(labels_g, axis=ax), labels_g)
        # TODO(synk): fold the D flip into the kernel (sublane reversal) to save
        # one more full-volume HBM pass.

        Bv, C, D, H, W = images_g.shape
        L = H * W
        if L % 128 != 0:
            # TODO(synk): pad the folded lane axis to a multiple of 128.
            raise ValueError(f"H*W={L} must be a multiple of 128 for the "
                             "lane-dense folded layout")
        images_f = images_g.reshape(Bv, C, D, L)

        # Skip pass-through samples (~61% have no flag set): only the flagged
        # subset pays the kernel's HBM round trip.
        active = np.nonzero(kflags[:, :3].any(axis=1))[0]
        if active.size > 0:
            idx = jnp.asarray(active, dtype=jnp.int32)
            sub_out = _pallas_augment(
                kflags[active], images_f[idx], self._kmat(H, W),
                w1=self._w1, w2=self._w2,
                noise_std=self.noise_std, gamma=self.gamma)
            images_f = images_f.at[idx].set(sub_out)

        images_out = images_f.reshape(Bv, C, D, H, W)
        # unsqueeze back per sample -> (B, 1, C, D, H, W)
        return images_out[:, None], labels_g[:, None]


# ------------------------------------ main -------------------------------------

if __name__ == "__main__":
    B, C, D, H, W = 2, 2, 8, 16, 16
    key = jax.random.PRNGKey(0)
    k_img, k_lbl = jax.random.split(key)
    images = jax.random.normal(k_img, (B, 1, C, D, H, W), dtype=jnp.float32)
    labels = jax.random.randint(k_lbl, (B, 1, C, D, H, W), 0, 4).astype(jnp.float32)

    augmenter = DataAugmenterJAX(seed=0)

    # Direct kernel smoke test: every augmentation branch forced on so the
    # pl.when paths (hash-PRNG noise, bf16 MXU sharpen, contrast) all execute.
    imgs_flat = images[:, 0].reshape(B, C, D, H * W)
    kmat = augmenter._kmat(H, W)
    flags_all_on = np.array([[1, 1, 1, 1000 + i] for i in range(B)], dtype=np.int32)
    forced = _pallas_augment(flags_all_on, imgs_flat, kmat,
                             w1=augmenter._w1, w2=augmenter._w2,
                             noise_std=augmenter.noise_std,
                             gamma=augmenter.gamma)
    forced = jax.block_until_ready(forced)
    assert forced.shape == (B, C, D, H * W)
    assert bool(jnp.all(jnp.isfinite(forced)))

    # Full module-equivalent path (host zoom + batched flips + Pallas kernel on
    # the flagged subset only).
    out_images, out_labels = augmenter(images, labels)
    jax.block_until_ready((out_images, out_labels))

    assert out_images.shape == images.shape
    assert out_labels.shape == labels.shape
    assert out_images.dtype == jnp.float32 and out_labels.dtype == jnp.float32
    print("KERNEL_OK")
</pallas_src>

<mosaic_0001>
module attributes {stable_mosaic.version = 11 : i64} {
  func.func @_augment_kernel(%arg0: i32, %arg1: memref<2x4xi32, #tpu.memory_space<smem>>, %arg2: memref<1x2x8x256xf32, #tpu.memory_space<vmem>>, %arg3: memref<256x512xbf16, #tpu.memory_space<vmem>>, %arg4: memref<1x2x8x256xf32, #tpu.memory_space<vmem>>) attributes {dimension_semantics = [#tpu.dimension_semantics<parallel>], iteration_bounds = array<i64: 2>, scalar_prefetch = 1 : i64, scratch_operands = 0 : i64, tpu.core_type = #tpu.core_type<tc>, window_params = [{transform_indices = @transform_0, window_bounds = array<i64: 1, 2, 8, 256>}, {pipeline_mode = #tpu.pipeline_mode<synchronous>, transform_indices = @transform_1, window_bounds = array<i64: 256, 512>}, {transform_indices = @transform_2, window_bounds = array<i64: 1, 2, 8, 256>}]} {
    %c0 = arith.constant 0 : index
    %c0_0 = arith.constant 0 : index
    %c0_1 = arith.constant 0 : index
    %c0_2 = arith.constant 0 : index
    %0 = vector.load %arg2[%c0, %c0_0, %c0_1, %c0_2] : memref<1x2x8x256xf32, #tpu.memory_space<vmem>>, vector<1x2x8x256xf32>
    %c0_3 = arith.constant 0 : index
    %c0_4 = arith.constant 0 : index
    %c0_5 = arith.constant 0 : index
    %c0_6 = arith.constant 0 : index
    %1 = vector.load %arg4[%c0_3, %c0_4, %c0_5, %c0_6] : memref<1x2x8x256xf32, #tpu.memory_space<vmem>>, vector<1x2x8x256xf32>
    tpu.vector_store %arg4[%c0_3, %c0_4, %c0_5, %c0_6], %0 {strides = array<i32>} : memref<1x2x8x256xf32, #tpu.memory_space<vmem>>, vector<1x2x8x256xf32>,
    %2 = arith.index_cast %arg0 : i32 to index
    %c0_7 = arith.constant 0 : index
    %3 = memref.load %arg1[%2, %c0_7] : memref<2x4xi32, #tpu.memory_space<smem>>
    %c1_i32 = arith.constant 1 : i32
    %4 = arith.cmpi eq, %3, %c1_i32 : i32
    %5 = arith.extui %4 : i1 to i32
    %c0_i32 = arith.constant 0 : i32
    %6 = arith.cmpi ne, %5, %c0_i32 : i32
    scf.if %6 {
      %17 = arith.index_cast %arg0 : i32 to index
      %c3 = arith.constant 3 : index
      %18 = memref.load %arg1[%17, %c3] : memref<2x4xi32, #tpu.memory_space<smem>>
      %19 = tpu.iota {dimensions = array<i32: 0>} : vector<16x256xi32>
      %20 = tpu.iota {dimensions = array<i32: 1>} : vector<16x256xi32>
      %c256_i32 = arith.constant 256 : i32
      %21 = vector.broadcast %c256_i32 : i32 to vector<16x256xi32>
      %22 = arith.muli %19, %21 : vector<16x256xi32>
      %23 = arith.addi %22, %20 : vector<16x256xi32>
      %c-1640531527_i32 = arith.constant -1640531527 : i32
      %24 = arith.muli %18, %c-1640531527_i32 : i32
      %25 = vector.broadcast %24 : i32 to vector<16x256xi32>
      %26 = arith.addi %23, %25 : vector<16x256xi32>
      %c0_i32_12 = arith.constant 0 : i32
      %27 = vector.broadcast %c0_i32_12 : i32 to vector<16x256xi32>
      %28 = arith.addi %26, %27 : vector<16x256xi32>
      %c16_i32 = arith.constant 16 : i32
      %29 = vector.broadcast %c16_i32 : i32 to vector<16x256xi32>
      %30 = arith.shrui %28, %29 : vector<16x256xi32>
      %31 = arith.xori %28, %30 : vector<16x256xi32>
      %c2146121005_i32 = arith.constant 2146121005 : i32
      %32 = vector.broadcast %c2146121005_i32 : i32 to vector<16x256xi32>
      %33 = arith.muli %31, %32 : vector<16x256xi32>
      %c15_i32 = arith.constant 15 : i32
      %34 = vector.broadcast %c15_i32 : i32 to vector<16x256xi32>
      %35 = arith.shrui %33, %34 : vector<16x256xi32>
      %36 = arith.xori %33, %35 : vector<16x256xi32>
      %c-2073254261_i32 = arith.constant -2073254261 : i32
      %37 = vector.broadcast %c-2073254261_i32 : i32 to vector<16x256xi32>
      %38 = arith.muli %36, %37 : vector<16x256xi32>
      %c16_i32_13 = arith.constant 16 : i32
      %39 = vector.broadcast %c16_i32_13 : i32 to vector<16x256xi32>
      %40 = arith.shrui %38, %39 : vector<16x256xi32>
      %41 = arith.xori %38, %40 : vector<16x256xi32>
      %c8_i32 = arith.constant 8 : i32
      %42 = vector.broadcast %c8_i32 : i32 to vector<16x256xi32>
      %43 = arith.shrui %41, %42 : vector<16x256xi32>
      %44 = arith.sitofp %43 : vector<16x256xi32> to vector<16x256xf32>
      %cst = arith.constant 5.96046448E-8 : f32
      %45 = vector.broadcast %cst : f32 to vector<16x256xf32>
      %46 = arith.mulf %44, %45 : vector<16x256xf32>
      %c-1640531527_i32_14 = arith.constant -1640531527 : i32
      %47 = arith.muli %18, %c-1640531527_i32_14 : i32
      %48 = vector.broadcast %47 : i32 to vector<16x256xi32>
      %49 = arith.addi %23, %48 : vector<16x256xi32>
      %c-2048144777_i32 = arith.constant -2048144777 : i32
      %50 = vector.broadcast %c-2048144777_i32 : i32 to vector<16x256xi32>
      %51 = arith.addi %49, %50 : vector<16x256xi32>
      %c16_i32_15 = arith.constant 16 : i32
      %52 = vector.broadcast %c16_i32_15 : i32 to vector<16x256xi32>
      %53 = arith.shrui %51, %52 : vector<16x256xi32>
      %54 = arith.xori %51, %53 : vector<16x256xi32>
      %c2146121005_i32_16 = arith.constant 2146121005 : i32
      %55 = vector.broadcast %c2146121005_i32_16 : i32 to vector<16x256xi32>
      %56 = arith.muli %54, %55 : vector<16x256xi32>
      %c15_i32_17 = arith.constant 15 : i32
      %57 = vector.broadcast %c15_i32_17 : i32 to vector<16x256xi32>
      %58 = arith.shrui %56, %57 : vector<16x256xi32>
      %59 = arith.xori %56, %58 : vector<16x256xi32>
      %c-2073254261_i32_18 = arith.constant -2073254261 : i32
      %60 = vector.broadcast %c-2073254261_i32_18 : i32 to vector<16x256xi32>
      %61 = arith.muli %59, %60 : vector<16x256xi32>
      %c16_i32_19 = arith.constant 16 : i32
      %62 = vector.broadcast %c16_i32_19 : i32 to vector<16x256xi32>
      %63 = arith.shrui %61, %62 : vector<16x256xi32>
      %64 = arith.xori %61, %63 : vector<16x256xi32>
      %c8_i32_20 = arith.constant 8 : i32
      %65 = vector.broadcast %c8_i32_20 : i32 to vector<16x256xi32>
      %66 = arith.shrui %64, %65 : vector<16x256xi32>
      %67 = arith.sitofp %66 : vector<16x256xi32> to vector<16x256xf32>
      %cst_21 = arith.constant 5.96046448E-8 : f32
      %68 = vector.broadcast %cst_21 : f32 to vector<16x256xf32>
      %69 = arith.mulf %67, %68 : vector<16x256xf32>
      %70 = arith.addf %46, %69 : vector<16x256xf32>
      %c-1640531527_i32_22 = arith.constant -1640531527 : i32
      %71 = arith.muli %18, %c-1640531527_i32_22 : i32
      %72 = vector.broadcast %71 : i32 to vector<16x256xi32>
      %73 = arith.addi %23, %72 : vector<16x256xi32>
      %c198677742_i32 = arith.constant 198677742 : i32
      %74 = vector.broadcast %c198677742_i32 : i32 to vector<16x256xi32>
      %75 = arith.addi %73, %74 : vector<16x256xi32>
      %c16_i32_23 = arith.constant 16 : i32
      %76 = vector.broadcast %c16_i32_23 : i32 to vector<16x256xi32>
      %77 = arith.shrui %75, %76 : vector<16x256xi32>
      %78 = arith.xori %75, %77 : vector<16x256xi32>
      %c2146121005_i32_24 = arith.constant 2146121005 : i32
      %79 = vector.broadcast %c2146121005_i32_24 : i32 to vector<16x256xi32>
      %80 = arith.muli %78, %79 : vector<16x256xi32>
      %c15_i32_25 = arith.constant 15 : i32
      %81 = vector.broadcast %c15_i32_25 : i32 to vector<16x256xi32>
      %82 = arith.shrui %80, %81 : vector<16x256xi32>
      %83 = arith.xori %80, %82 : vector<16x256xi32>
      %c-2073254261_i32_26 = arith.constant -2073254261 : i32
      %84 = vector.broadcast %c-2073254261_i32_26 : i32 to vector<16x256xi32>
      %85 = arith.muli %83, %84 : vector<16x256xi32>
      %c16_i32_27 = arith.constant 16 : i32
      %86 = vector.broadcast %c16_i32_27 : i32 to vector<16x256xi32>
      %87 = arith.shrui %85, %86 : vector<16x256xi32>
      %88 = arith.xori %85, %87 : vector<16x256xi32>
      %c8_i32_28 = arith.constant 8 : i32
      %89 = vector.broadcast %c8_i32_28 : i32 to vector<16x256xi32>
      %90 = arith.shrui %88, %89 : vector<16x256xi32>
      %91 = arith.sitofp %90 : vector<16x256xi32> to vector<16x256xf32>
      %cst_29 = arith.constant 5.96046448E-8 : f32
      %92 = vector.broadcast %cst_29 : f32 to vector<16x256xf32>
      %93 = arith.mulf %91, %92 : vector<16x256xf32>
      %94 = arith.addf %70, %93 : vector<16x256xf32>
      %c-1640531527_i32_30 = arith.constant -1640531527 : i32
      %95 = arith.muli %18, %c-1640531527_i32_30 : i32
      %96 = vector.broadcast %95 : i32 to vector<16x256xi32>
      %97 = arith.addi %23, %96 : vector<16x256xi32>
      %c-1849467035_i32 = arith.constant -1849467035 : i32
      %98 = vector.broadcast %c-1849467035_i32 : i32 to vector<16x256xi32>
      %99 = arith.addi %97, %98 : vector<16x256xi32>
      %c16_i32_31 = arith.constant 16 : i32
      %100 = vector.broadcast %c16_i32_31 : i32 to vector<16x256xi32>
      %101 = arith.shrui %99, %100 : vector<16x256xi32>
      %102 = arith.xori %99, %101 : vector<16x256xi32>
      %c2146121005_i32_32 = arith.constant 2146121005 : i32
      %103 = vector.broadcast %c2146121005_i32_32 : i32 to vector<16x256xi32>
      %104 = arith.muli %102, %103 : vector<16x256xi32>
      %c15_i32_33 = arith.constant 15 : i32
      %105 = vector.broadcast %c15_i32_33 : i32 to vector<16x256xi32>
      %106 = arith.shrui %104, %105 : vector<16x256xi32>
      %107 = arith.xori %104, %106 : vector<16x256xi32>
      %c-2073254261_i32_34 = arith.constant -2073254261 : i32
      %108 = vector.broadcast %c-2073254261_i32_34 : i32 to vector<16x256xi32>
      %109 = arith.muli %107, %108 : vector<16x256xi32>
      %c16_i32_35 = arith.constant 16 : i32
      %110 = vector.broadcast %c16_i32_35 : i32 to vector<16x256xi32>
      %111 = arith.shrui %109, %110 : vector<16x256xi32>
      %112 = arith.xori %109, %111 : vector<16x256xi32>
      %c8_i32_36 = arith.constant 8 : i32
      %113 = vector.broadcast %c8_i32_36 : i32 to vector<16x256xi32>
      %114 = arith.shrui %112, %113 : vector<16x256xi32>
      %115 = arith.sitofp %114 : vector<16x256xi32> to vector<16x256xf32>
      %cst_37 = arith.constant 5.96046448E-8 : f32
      %116 = vector.broadcast %cst_37 : f32 to vector<16x256xf32>
      %117 = arith.mulf %115, %116 : vector<16x256xf32>
      %118 = arith.addf %94, %117 : vector<16x256xf32>
      %c-1640531527_i32_38 = arith.constant -1640531527 : i32
      %119 = arith.muli %18, %c-1640531527_i32_38 : i32
      %120 = vector.broadcast %119 : i32 to vector<16x256xi32>
      %121 = arith.addi %23, %120 : vector<16x256xi32>
      %c397355484_i32 = arith.constant 397355484 : i32
      %122 = vector.broadcast %c397355484_i32 : i32 to vector<16x256xi32>
      %123 = arith.addi %121, %122 : vector<16x256xi32>
      %c16_i32_39 = arith.constant 16 : i32
      %124 = vector.broadcast %c16_i32_39 : i32 to vector<16x256xi32>
      %125 = arith.shrui %123, %124 : vector<16x256xi32>
      %126 = arith.xori %123, %125 : vector<16x256xi32>
      %c2146121005_i32_40 = arith.constant 2146121005 : i32
      %127 = vector.broadcast %c2146121005_i32_40 : i32 to vector<16x256xi32>
      %128 = arith.muli %126, %127 : vector<16x256xi32>
      %c15_i32_41 = arith.constant 15 : i32
      %129 = vector.broadcast %c15_i32_41 : i32 to vector<16x256xi32>
      %130 = arith.shrui %128, %129 : vector<16x256xi32>
      %131 = arith.xori %128, %130 : vector<16x256xi32>
      %c-2073254261_i32_42 = arith.constant -2073254261 : i32
      %132 = vector.broadcast %c-2073254261_i32_42 : i32 to vector<16x256xi32>
      %133 = arith.muli %131, %132 : vector<16x256xi32>
      %c16_i32_43 = arith.constant 16 : i32
      %134 = vector.broadcast %c16_i32_43 : i32 to vector<16x256xi32>
      %135 = arith.shrui %133, %134 : vector<16x256xi32>
      %136 = arith.xori %133, %135 : vector<16x256xi32>
      %c8_i32_44 = arith.constant 8 : i32
      %137 = vector.broadcast %c8_i32_44 : i32 to vector<16x256xi32>
      %138 = arith.shrui %136, %137 : vector<16x256xi32>
      %139 = arith.sitofp %138 : vector<16x256xi32> to vector<16x256xf32>
      %cst_45 = arith.constant 5.96046448E-8 : f32
      %140 = vector.broadcast %cst_45 : f32 to vector<16x256xf32>
      %141 = arith.mulf %139, %140 : vector<16x256xf32>
      %142 = arith.addf %118, %141 : vector<16x256xf32>
      %c-1640531527_i32_46 = arith.constant -1640531527 : i32
      %143 = arith.muli %18, %c-1640531527_i32_46 : i32
      %144 = vector.broadcast %143 : i32 to vector<16x256xi32>
      %145 = arith.addi %23, %144 : vector<16x256xi32>
      %c-1650789293_i32 = arith.constant -1650789293 : i32
      %146 = vector.broadcast %c-1650789293_i32 : i32 to vector<16x256xi32>
      %147 = arith.addi %145, %146 : vector<16x256xi32>
      %c16_i32_47 = arith.constant 16 : i32
      %148 = vector.broadcast %c16_i32_47 : i32 to vector<16x256xi32>
      %149 = arith.shrui %147, %148 : vector<16x256xi32>
      %150 = arith.xori %147, %149 : vector<16x256xi32>
      %c2146121005_i32_48 = arith.constant 2146121005 : i32
      %151 = vector.broadcast %c2146121005_i32_48 : i32 to vector<16x256xi32>
      %152 = arith.muli %150, %151 : vector<16x256xi32>
      %c15_i32_49 = arith.constant 15 : i32
      %153 = vector.broadcast %c15_i32_49 : i32 to vector<16x256xi32>
      %154 = arith.shrui %152, %153 : vector<16x256xi32>
      %155 = arith.xori %152, %154 : vector<16x256xi32>
      %c-2073254261_i32_50 = arith.constant -2073254261 : i32
      %156 = vector.broadcast %c-2073254261_i32_50 : i32 to vector<16x256xi32>
      %157 = arith.muli %155, %156 : vector<16x256xi32>
      %c16_i32_51 = arith.constant 16 : i32
      %158 = vector.broadcast %c16_i32_51 : i32 to vector<16x256xi32>
      %159 = arith.shrui %157, %158 : vector<16x256xi32>
      %160 = arith.xori %157, %159 : vector<16x256xi32>
      %c8_i32_52 = arith.constant 8 : i32
      %161 = vector.broadcast %c8_i32_52 : i32 to vector<16x256xi32>
      %162 = arith.shrui %160, %161 : vector<16x256xi32>
      %163 = arith.sitofp %162 : vector<16x256xi32> to vector<16x256xf32>
      %cst_53 = arith.constant 5.96046448E-8 : f32
      %164 = vector.broadcast %cst_53 : f32 to vector<16x256xf32>
      %165 = arith.mulf %163, %164 : vector<16x256xf32>
      %166 = arith.addf %142, %165 : vector<16x256xf32>
      %c-1640531527_i32_54 = arith.constant -1640531527 : i32
      %167 = arith.muli %18, %c-1640531527_i32_54 : i32
      %168 = vector.broadcast %167 : i32 to vector<16x256xi32>
      %169 = arith.addi %23, %168 : vector<16x256xi32>
      %c596033226_i32 = arith.constant 596033226 : i32
      %170 = vector.broadcast %c596033226_i32 : i32 to vector<16x256xi32>
      %171 = arith.addi %169, %170 : vector<16x256xi32>
      %c16_i32_55 = arith.constant 16 : i32
      %172 = vector.broadcast %c16_i32_55 : i32 to vector<16x256xi32>
      %173 = arith.shrui %171, %172 : vector<16x256xi32>
      %174 = arith.xori %171, %173 : vector<16x256xi32>
      %c2146121005_i32_56 = arith.constant 2146121005 : i32
      %175 = vector.broadcast %c2146121005_i32_56 : i32 to vector<16x256xi32>
      %176 = arith.muli %174, %175 : vector<16x256xi32>
      %c15_i32_57 = arith.constant 15 : i32
      %177 = vector.broadcast %c15_i32_57 : i32 to vector<16x256xi32>
      %178 = arith.shrui %176, %177 : vector<16x256xi32>
      %179 = arith.xori %176, %178 : vector<16x256xi32>
      %c-2073254261_i32_58 = arith.constant -2073254261 : i32
      %180 = vector.broadcast %c-2073254261_i32_58 : i32 to vector<16x256xi32>
      %181 = arith.muli %179, %180 : vector<16x256xi32>
      %c16_i32_59 = arith.constant 16 : i32
      %182 = vector.broadcast %c16_i32_59 : i32 to vector<16x256xi32>
      %183 = arith.shrui %181, %182 : vector<16x256xi32>
      %184 = arith.xori %181, %183 : vector<16x256xi32>
      %c8_i32_60 = arith.constant 8 : i32
      %185 = vector.broadcast %c8_i32_60 : i32 to vector<16x256xi32>
      %186 = arith.shrui %184, %185 : vector<16x256xi32>
      %187 = arith.sitofp %186 : vector<16x256xi32> to vector<16x256xf32>
      %cst_61 = arith.constant 5.96046448E-8 : f32
      %188 = vector.broadcast %cst_61 : f32 to vector<16x256xf32>
      %189 = arith.mulf %187, %188 : vector<16x256xf32>
      %190 = arith.addf %166, %189 : vector<16x256xf32>
      %c-1640531527_i32_62 = arith.constant -1640531527 : i32
      %191 = arith.muli %18, %c-1640531527_i32_62 : i32
      %192 = vector.broadcast %191 : i32 to vector<16x256xi32>
      %193 = arith.addi %23, %192 : vector<16x256xi32>
      %c-1452111551_i32 = arith.constant -1452111551 : i32
      %194 = vector.broadcast %c-1452111551_i32 : i32 to vector<16x256xi32>
      %195 = arith.addi %193, %194 : vector<16x256xi32>
      %c16_i32_63 = arith.constant 16 : i32
      %196 = vector.broadcast %c16_i32_63 : i32 to vector<16x256xi32>
      %197 = arith.shrui %195, %196 : vector<16x256xi32>
      %198 = arith.xori %195, %197 : vector<16x256xi32>
      %c2146121005_i32_64 = arith.constant 2146121005 : i32
      %199 = vector.broadcast %c2146121005_i32_64 : i32 to vector<16x256xi32>
      %200 = arith.muli %198, %199 : vector<16x256xi32>
      %c15_i32_65 = arith.constant 15 : i32
      %201 = vector.broadcast %c15_i32_65 : i32 to vector<16x256xi32>
      %202 = arith.shrui %200, %201 : vector<16x256xi32>
      %203 = arith.xori %200, %202 : vector<16x256xi32>
      %c-2073254261_i32_66 = arith.constant -2073254261 : i32
      %204 = vector.broadcast %c-2073254261_i32_66 : i32 to vector<16x256xi32>
      %205 = arith.muli %203, %204 : vector<16x256xi32>
      %c16_i32_67 = arith.constant 16 : i32
      %206 = vector.broadcast %c16_i32_67 : i32 to vector<16x256xi32>
      %207 = arith.shrui %205, %206 : vector<16x256xi32>
      %208 = arith.xori %205, %207 : vector<16x256xi32>
      %c8_i32_68 = arith.constant 8 : i32
      %209 = vector.broadcast %c8_i32_68 : i32 to vector<16x256xi32>
      %210 = arith.shrui %208, %209 : vector<16x256xi32>
      %211 = arith.sitofp %210 : vector<16x256xi32> to vector<16x256xf32>
      %cst_69 = arith.constant 5.96046448E-8 : f32
      %212 = vector.broadcast %cst_69 : f32 to vector<16x256xf32>
      %213 = arith.mulf %211, %212 : vector<16x256xf32>
      %214 = arith.addf %190, %213 : vector<16x256xf32>
      %c-1640531527_i32_70 = arith.constant -1640531527 : i32
      %215 = arith.muli %18, %c-1640531527_i32_70 : i32
      %216 = vector.broadcast %215 : i32 to vector<16x256xi32>
      %217 = arith.addi %23, %216 : vector<16x256xi32>
      %c794710968_i32 = arith.constant 794710968 : i32
      %218 = vector.broadcast %c794710968_i32 : i32 to vector<16x256xi32>
      %219 = arith.addi %217, %218 : vector<16x256xi32>
      %c16_i32_71 = arith.constant 16 : i32
      %220 = vector.broadcast %c16_i32_71 : i32 to vector<16x256xi32>
      %221 = arith.shrui %219, %220 : vector<16x256xi32>
      %222 = arith.xori %219, %221 : vector<16x256xi32>
      %c2146121005_i32_72 = arith.constant 2146121005 : i32
      %223 = vector.broadcast %c2146121005_i32_72 : i32 to vector<16x256xi32>
      %224 = arith.muli %222, %223 : vector<16x256xi32>
      %c15_i32_73 = arith.constant 15 : i32
      %225 = vector.broadcast %c15_i32_73 : i32 to vector<16x256xi32>
      %226 = arith.shrui %224, %225 : vector<16x256xi32>
      %227 = arith.xori %224, %226 : vector<16x256xi32>
      %c-2073254261_i32_74 = arith.constant -2073254261 : i32
      %228 = vector.broadcast %c-2073254261_i32_74 : i32 to vector<16x256xi32>
      %229 = arith.muli %227, %228 : vector<16x256xi32>
      %c16_i32_75 = arith.constant 16 : i32
      %230 = vector.broadcast %c16_i32_75 : i32 to vector<16x256xi32>
      %231 = arith.shrui %229, %230 : vector<16x256xi32>
      %232 = arith.xori %229, %231 : vector<16x256xi32>
      %c8_i32_76 = arith.constant 8 : i32
      %233 = vector.broadcast %c8_i32_76 : i32 to vector<16x256xi32>
      %234 = arith.shrui %232, %233 : vector<16x256xi32>
      %235 = arith.sitofp %234 : vector<16x256xi32> to vector<16x256xf32>
      %cst_77 = arith.constant 5.96046448E-8 : f32
      %236 = vector.broadcast %cst_77 : f32 to vector<16x256xf32>
      %237 = arith.mulf %235, %236 : vector<16x256xf32>
      %238 = arith.addf %214, %237 : vector<16x256xf32>
      %c-1640531527_i32_78 = arith.constant -1640531527 : i32
      %239 = arith.muli %18, %c-1640531527_i32_78 : i32
      %240 = vector.broadcast %239 : i32 to vector<16x256xi32>
      %241 = arith.addi %23, %240 : vector<16x256xi32>
      %c-1253433809_i32 = arith.constant -1253433809 : i32
      %242 = vector.broadcast %c-1253433809_i32 : i32 to vector<16x256xi32>
      %243 = arith.addi %241, %242 : vector<16x256xi32>
      %c16_i32_79 = arith.constant 16 : i32
      %244 = vector.broadcast %c16_i32_79 : i32 to vector<16x256xi32>
      %245 = arith.shrui %243, %244 : vector<16x256xi32>
      %246 = arith.xori %243, %245 : vector<16x256xi32>
      %c2146121005_i32_80 = arith.constant 2146121005 : i32
      %247 = vector.broadcast %c2146121005_i32_80 : i32 to vector<16x256xi32>
      %248 = arith.muli %246, %247 : vector<16x256xi32>
      %c15_i32_81 = arith.constant 15 : i32
      %249 = vector.broadcast %c15_i32_81 : i32 to vector<16x256xi32>
      %250 = arith.shrui %248, %249 : vector<16x256xi32>
      %251 = arith.xori %248, %250 : vector<16x256xi32>
      %c-2073254261_i32_82 = arith.constant -2073254261 : i32
      %252 = vector.broadcast %c-2073254261_i32_82 : i32 to vector<16x256xi32>
      %253 = arith.muli %251, %252 : vector<16x256xi32>
      %c16_i32_83 = arith.constant 16 : i32
      %254 = vector.broadcast %c16_i32_83 : i32 to vector<16x256xi32>
      %255 = arith.shrui %253, %254 : vector<16x256xi32>
      %256 = arith.xori %253, %255 : vector<16x256xi32>
      %c8_i32_84 = arith.constant 8 : i32
      %257 = vector.broadcast %c8_i32_84 : i32 to vector<16x256xi32>
      %258 = arith.shrui %256, %257 : vector<16x256xi32>
      %259 = arith.sitofp %258 : vector<16x256xi32> to vector<16x256xf32>
      %cst_85 = arith.constant 5.96046448E-8 : f32
      %260 = vector.broadcast %cst_85 : f32 to vector<16x256xf32>
      %261 = arith.mulf %259, %260 : vector<16x256xf32>
      %262 = arith.addf %238, %261 : vector<16x256xf32>
      %c-1640531527_i32_86 = arith.constant -1640531527 : i32
      %263 = arith.muli %18, %c-1640531527_i32_86 : i32
      %264 = vector.broadcast %263 : i32 to vector<16x256xi32>
      %265 = arith.addi %23, %264 : vector<16x256xi32>
      %c993388710_i32 = arith.constant 993388710 : i32
      %266 = vector.broadcast %c993388710_i32 : i32 to vector<16x256xi32>
      %267 = arith.addi %265, %266 : vector<16x256xi32>
      %c16_i32_87 = arith.constant 16 : i32
      %268 = vector.broadcast %c16_i32_87 : i32 to vector<16x256xi32>
      %269 = arith.shrui %267, %268 : vector<16x256xi32>
      %270 = arith.xori %267, %269 : vector<16x256xi32>
      %c2146121005_i32_88 = arith.constant 2146121005 : i32
      %271 = vector.broadcast %c2146121005_i32_88 : i32 to vector<16x256xi32>
      %272 = arith.muli %270, %271 : vector<16x256xi32>
      %c15_i32_89 = arith.constant 15 : i32
      %273 = vector.broadcast %c15_i32_89 : i32 to vector<16x256xi32>
      %274 = arith.shrui %272, %273 : vector<16x256xi32>
      %275 = arith.xori %272, %274 : vector<16x256xi32>
      %c-2073254261_i32_90 = arith.constant -2073254261 : i32
      %276 = vector.broadcast %c-2073254261_i32_90 : i32 to vector<16x256xi32>
      %277 = arith.muli %275, %276 : vector<16x256xi32>
      %c16_i32_91 = arith.constant 16 : i32
      %278 = vector.broadcast %c16_i32_91 : i32 to vector<16x256xi32>
      %279 = arith.shrui %277, %278 : vector<16x256xi32>
      %280 = arith.xori %277, %279 : vector<16x256xi32>
      %c8_i32_92 = arith.constant 8 : i32
      %281 = vector.broadcast %c8_i32_92 : i32 to vector<16x256xi32>
      %282 = arith.shrui %280, %281 : vector<16x256xi32>
      %283 = arith.sitofp %282 : vector<16x256xi32> to vector<16x256xf32>
      %cst_93 = arith.constant 5.96046448E-8 : f32
      %284 = vector.broadcast %cst_93 : f32 to vector<16x256xf32>
      %285 = arith.mulf %283, %284 : vector<16x256xf32>
      %286 = arith.addf %262, %285 : vector<16x256xf32>
      %c-1640531527_i32_94 = arith.constant -1640531527 : i32
      %287 = arith.muli %18, %c-1640531527_i32_94 : i32
      %288 = vector.broadcast %287 : i32 to vector<16x256xi32>
      %289 = arith.addi %23, %288 : vector<16x256xi32>
      %c-1054756067_i32 = arith.constant -1054756067 : i32
      %290 = vector.broadcast %c-1054756067_i32 : i32 to vector<16x256xi32>
      %291 = arith.addi %289, %290 : vector<16x256xi32>
      %c16_i32_95 = arith.constant 16 : i32
      %292 = vector.broadcast %c16_i32_95 : i32 to vector<16x256xi32>
      %293 = arith.shrui %291, %292 : vector<16x256xi32>
      %294 = arith.xori %291, %293 : vector<16x256xi32>
      %c2146121005_i32_96 = arith.constant 2146121005 : i32
      %295 = vector.broadcast %c2146121005_i32_96 : i32 to vector<16x256xi32>
      %296 = arith.muli %294, %295 : vector<16x256xi32>
      %c15_i32_97 = arith.constant 15 : i32
      %297 = vector.broadcast %c15_i32_97 : i32 to vector<16x256xi32>
      %298 = arith.shrui %296, %297 : vector<16x256xi32>
      %299 = arith.xori %296, %298 : vector<16x256xi32>
      %c-2073254261_i32_98 = arith.constant -2073254261 : i32
      %300 = vector.broadcast %c-2073254261_i32_98 : i32 to vector<16x256xi32>
      %301 = arith.muli %299, %300 : vector<16x256xi32>
      %c16_i32_99 = arith.constant 16 : i32
      %302 = vector.broadcast %c16_i32_99 : i32 to vector<16x256xi32>
      %303 = arith.shrui %301, %302 : vector<16x256xi32>
      %304 = arith.xori %301, %303 : vector<16x256xi32>
      %c8_i32_100 = arith.constant 8 : i32
      %305 = vector.broadcast %c8_i32_100 : i32 to vector<16x256xi32>
      %306 = arith.shrui %304, %305 : vector<16x256xi32>
      %307 = arith.sitofp %306 : vector<16x256xi32> to vector<16x256xf32>
      %cst_101 = arith.constant 5.96046448E-8 : f32
      %308 = vector.broadcast %cst_101 : f32 to vector<16x256xf32>
      %309 = arith.mulf %307, %308 : vector<16x256xf32>
      %310 = arith.addf %286, %309 : vector<16x256xf32>
      %cst_102 = arith.constant 6.000000e+00 : f32
      %311 = vector.broadcast %cst_102 : f32 to vector<16x256xf32>
      %312 = arith.subf %310, %311 : vector<16x256xf32>
      %313 = vector.shape_cast %312 : vector<16x256xf32> to vector<2x8x256xf32>
      %c0_103 = arith.constant 0 : index
      %c0_104 = arith.constant 0 : index
      %c0_105 = arith.constant 0 : index
      %c0_106 = arith.constant 0 : index
      %314 = vector.load %arg4[%c0_103, %c0_104, %c0_105, %c0_106] : memref<1x2x8x256xf32, #tpu.memory_space<vmem>>, vector<1x2x8x256xf32>
      %315 = vector.shape_cast %314 : vector<1x2x8x256xf32> to vector<2x8x256xf32>
      %cst_107 = arith.constant 0.0854425281 : f32
      %316 = vector.broadcast %cst_107 : f32 to vector<2x8x256xf32>
      %317 = arith.mulf %316, %313 : vector<2x8x256xf32>
      %318 = arith.addf %315, %317 : vector<2x8x256xf32>
      %c0_108 = arith.constant 0 : index
      %c0_109 = arith.constant 0 : index
      %c0_110 = arith.constant 0 : index
      %c0_111 = arith.constant 0 : index
      %319 = vector.load %arg4[%c0_108, %c0_109, %c0_110, %c0_111] : memref<1x2x8x256xf32, #tpu.memory_space<vmem>>, vector<1x2x8x256xf32>
      %320 = vector.shape_cast %319 : vector<1x2x8x256xf32> to vector<2x8x256xf32>
      %321 = vector.shape_cast %318 : vector<2x8x256xf32> to vector<1x2x8x256xf32>
      tpu.vector_store %arg4[%c0_108, %c0_109, %c0_110, %c0_111], %321 {strides = array<i32>} : memref<1x2x8x256xf32, #tpu.memory_space<vmem>>, vector<1x2x8x256xf32>,
    } else {
    }
    %7 = arith.index_cast %arg0 : i32 to index
    %c1 = arith.constant 1 : index
    %8 = memref.load %arg1[%7, %c1] : memref<2x4xi32, #tpu.memory_space<smem>>
    %c1_i32_8 = arith.constant 1 : i32
    %9 = arith.cmpi eq, %8, %c1_i32_8 : i32
    %10 = arith.extui %9 : i1 to i32
    %c0_i32_9 = arith.constant 0 : i32
    %11 = arith.cmpi ne, %10, %c0_i32_9 : i32
    scf.if %11 {
      %c0_12 = arith.constant 0 : index
      %c0_13 = arith.constant 0 : index
      %c0_14 = arith.constant 0 : index
      %c0_15 = arith.constant 0 : index
      %17 = vector.load %arg4[%c0_12, %c0_13, %c0_14, %c0_15] : memref<1x2x8x256xf32, #tpu.memory_space<vmem>>, vector<1x2x8x256xf32>
      %18 = vector.shape_cast %17 : vector<1x2x8x256xf32> to vector<2x8x256xf32>
      %19 = vector.shape_cast %18 : vector<2x8x256xf32> to vector<16x256xf32>
      %20 = arith.truncf %19 : vector<16x256xf32> to vector<16x256xbf16>
      %c0_16 = arith.constant 0 : index
      %c0_17 = arith.constant 0 : index
      %21 = vector.load %arg3[%c0_16, %c0_17] : memref<256x512xbf16, #tpu.memory_space<vmem>>, vector<256x512xbf16>
      %cst = arith.constant dense<0.000000e+00> : vector<16x512xf32>
      %22 = tpu.matmul %20, %21, %cst {dimension_numbers = #tpu.dot_dimension_numbers<[1], [0], [0], [1], [0, 0, 1, 1], [], []>} : vector<16x256xbf16>, vector<256x512xbf16>, vector<16x512xf32> -> vector<16x512xf32>
      %23 = vector.extract_strided_slice %22 {offsets = [0, 0], sizes = [16, 256], strides = [1, 1]} : vector<16x512xf32> to vector<16x256xf32>
      %24 = vector.shape_cast %23 : vector<16x256xf32> to vector<2x8x256xf32>
      %25 = vector.extract_strided_slice %22 {offsets = [0, 256], sizes = [16, 256], strides = [1, 1]} : vector<16x512xf32> to vector<16x256xf32>
      %26 = vector.shape_cast %25 : vector<16x256xf32> to vector<2x8x256xf32>
      %cst_18 = arith.constant 0.000000e+00 : f32
      %27 = vector.broadcast %cst_18 : f32 to vector<2x5x256xf32>
      %28 = tpu.concatenate %27, %24, %27 in 1 : vector<2x5x256xf32>, vector<2x8x256xf32>, vector<2x5x256xf32> -> vector<2x18x256xf32>
      %29 = vector.extract_strided_slice %28 {offsets = [0, 0, 0], sizes = [2, 8, 256], strides = [1, 1, 1]} : vector<2x18x256xf32> to vector<2x8x256xf32>
      %cst_19 = arith.constant 1.67472535E-4 : f32
      %30 = vector.broadcast %cst_19 : f32 to vector<2x8x256xf32>
      %31 = arith.mulf %30, %29 : vector<2x8x256xf32>
      %32 = vector.extract_strided_slice %28 {offsets = [0, 1, 0], sizes = [2, 8, 256], strides = [1, 1, 1]} : vector<2x18x256xf32> to vector<2x8x256xf32>
      %cst_20 = arith.constant 0.00252517615 : f32
      %33 = vector.broadcast %cst_20 : f32 to vector<2x8x256xf32>
      %34 = arith.mulf %33, %32 : vector<2x8x256xf32>
      %35 = arith.addf %31, %34 : vector<2x8x256xf32>
      %36 = vector.extract_strided_slice %28 {offsets = [0, 2, 0], sizes = [2, 8, 256], strides = [1, 1, 1]} : vector<2x18x256xf32> to vector<2x8x256xf32>
      %cst_21 = arith.constant 0.0207428224 : f32
      %37 = vector.broadcast %cst_21 : f32 to vector<2x8x256xf32>
      %38 = arith.mulf %37, %36 : vector<2x8x256xf32>
      %39 = arith.addf %35, %38 : vector<2x8x256xf32>
      %40 = vector.extract_strided_slice %28 {offsets = [0, 3, 0], sizes = [2, 8, 256], strides = [1, 1, 1]} : vector<2x18x256xf32> to vector<2x8x256xf32>
      %cst_22 = arith.constant 0.0931082367 : f32
      %41 = vector.broadcast %cst_22 : f32 to vector<2x8x256xf32>
      %42 = arith.mulf %41, %40 : vector<2x8x256xf32>
      %43 = arith.addf %39, %42 : vector<2x8x256xf32>
      %44 = vector.extract_strided_slice %28 {offsets = [0, 4, 0], sizes = [2, 8, 256], strides = [1, 1, 1]} : vector<2x18x256xf32> to vector<2x8x256xf32>
      %cst_23 = arith.constant 0.228960335 : f32
      %45 = vector.broadcast %cst_23 : f32 to vector<2x8x256xf32>
      %46 = arith.mulf %45, %44 : vector<2x8x256xf32>
      %47 = arith.addf %43, %46 : vector<2x8x256xf32>
      %48 = vector.extract_strided_slice %28 {offsets = [0, 5, 0], sizes = [2, 8, 256], strides = [1, 1, 1]} : vector<2x18x256xf32> to vector<2x8x256xf32>
      %cst_24 = arith.constant 0.308979601 : f32
      %49 = vector.broadcast %cst_24 : f32 to vector<2x8x256xf32>
      %50 = arith.mulf %49, %48 : vector<2x8x256xf32>
      %51 = arith.addf %47, %50 : vector<2x8x256xf32>
      %52 = vector.extract_strided_slice %28 {offsets = [0, 6, 0], sizes = [2, 8, 256], strides = [1, 1, 1]} : vector<2x18x256xf32> to vector<2x8x256xf32>
      %cst_25 = arith.constant 0.228960335 : f32
      %53 = vector.broadcast %cst_25 : f32 to vector<2x8x256xf32>
      %54 = arith.mulf %53, %52 : vector<2x8x256xf32>
      %55 = arith.addf %51, %54 : vector<2x8x256xf32>
      %56 = vector.extract_strided_slice %28 {offsets = [0, 7, 0], sizes = [2, 8, 256], strides = [1, 1, 1]} : vector<2x18x256xf32> to vector<2x8x256xf32>
      %cst_26 = arith.constant 0.0931082367 : f32
      %57 = vector.broadcast %cst_26 : f32 to vector<2x8x256xf32>
      %58 = arith.mulf %57, %56 : vector<2x8x256xf32>
      %59 = arith.addf %55, %58 : vector<2x8x256xf32>
      %60 = vector.extract_strided_slice %28 {offsets = [0, 8, 0], sizes = [2, 8, 256], strides = [1, 1, 1]} : vector<2x18x256xf32> to vector<2x8x256xf32>
      %cst_27 = arith.constant 0.0207428224 : f32
      %61 = vector.broadcast %cst_27 : f32 to vector<2x8x256xf32>
      %62 = arith.mulf %61, %60 : vector<2x8x256xf32>
      %63 = arith.addf %59, %62 : vector<2x8x256xf32>
      %64 = vector.extract_strided_slice %28 {offsets = [0, 9, 0], sizes = [2, 8, 256], strides = [1, 1, 1]} : vector<2x18x256xf32> to vector<2x8x256xf32>
      %cst_28 = arith.constant 0.00252517615 : f32
      %65 = vector.broadcast %cst_28 : f32 to vector<2x8x256xf32>
      %66 = arith.mulf %65, %64 : vector<2x8x256xf32>
      %67 = arith.addf %63, %66 : vector<2x8x256xf32>
      %68 = vector.extract_strided_slice %28 {offsets = [0, 10, 0], sizes = [2, 8, 256], strides = [1, 1, 1]} : vector<2x18x256xf32> to vector<2x8x256xf32>
      %cst_29 = arith.constant 1.67472535E-4 : f32
      %69 = vector.broadcast %cst_29 : f32 to vector<2x8x256xf32>
      %70 = arith.mulf %69, %68 : vector<2x8x256xf32>
      %71 = arith.addf %67, %70 : vector<2x8x256xf32>
      %cst_30 = arith.constant 0.000000e+00 : f32
      %72 = vector.broadcast %cst_30 : f32 to vector<2x5x256xf32>
      %73 = tpu.concatenate %72, %26, %72 in 1 : vector<2x5x256xf32>, vector<2x8x256xf32>, vector<2x5x256xf32> -> vector<2x18x256xf32>
      %74 = vector.extract_strided_slice %73 {offsets = [0, 0, 0], sizes = [2, 8, 256], strides = [1, 1, 1]} : vector<2x18x256xf32> to vector<2x8x256xf32>
      %cst_31 = arith.constant 1.67472535E-4 : f32
      %75 = vector.broadcast %cst_31 : f32 to vector<2x8x256xf32>
      %76 = arith.mulf %75, %74 : vector<2x8x256xf32>
      %77 = vector.extract_strided_slice %73 {offsets = [0, 1, 0], sizes = [2, 8, 256], strides = [1, 1, 1]} : vector<2x18x256xf32> to vector<2x8x256xf32>
      %cst_32 = arith.constant 0.00252517615 : f32
      %78 = vector.broadcast %cst_32 : f32 to vector<2x8x256xf32>
      %79 = arith.mulf %78, %77 : vector<2x8x256xf32>
      %80 = arith.addf %76, %79 : vector<2x8x256xf32>
      %81 = vector.extract_strided_slice %73 {offsets = [0, 2, 0], sizes = [2, 8, 256], strides = [1, 1, 1]} : vector<2x18x256xf32> to vector<2x8x256xf32>
      %cst_33 = arith.constant 0.0207428224 : f32
      %82 = vector.broadcast %cst_33 : f32 to vector<2x8x256xf32>
      %83 = arith.mulf %82, %81 : vector<2x8x256xf32>
      %84 = arith.addf %80, %83 : vector<2x8x256xf32>
      %85 = vector.extract_strided_slice %73 {offsets = [0, 3, 0], sizes = [2, 8, 256], strides = [1, 1, 1]} : vector<2x18x256xf32> to vector<2x8x256xf32>
      %cst_34 = arith.constant 0.0931082367 : f32
      %86 = vector.broadcast %cst_34 : f32 to vector<2x8x256xf32>
      %87 = arith.mulf %86, %85 : vector<2x8x256xf32>
      %88 = arith.addf %84, %87 : vector<2x8x256xf32>
      %89 = vector.extract_strided_slice %73 {offsets = [0, 4, 0], sizes = [2, 8, 256], strides = [1, 1, 1]} : vector<2x18x256xf32> to vector<2x8x256xf32>
      %cst_35 = arith.constant 0.228960335 : f32
      %90 = vector.broadcast %cst_35 : f32 to vector<2x8x256xf32>
      %91 = arith.mulf %90, %89 : vector<2x8x256xf32>
      %92 = arith.addf %88, %91 : vector<2x8x256xf32>
      %93 = vector.extract_strided_slice %73 {offsets = [0, 5, 0], sizes = [2, 8, 256], strides = [1, 1, 1]} : vector<2x18x256xf32> to vector<2x8x256xf32>
      %cst_36 = arith.constant 0.308979601 : f32
      %94 = vector.broadcast %cst_36 : f32 to vector<2x8x256xf32>
      %95 = arith.mulf %94, %93 : vector<2x8x256xf32>
      %96 = arith.addf %92, %95 : vector<2x8x256xf32>
      %97 = vector.extract_strided_slice %73 {offsets = [0, 6, 0], sizes = [2, 8, 256], strides = [1, 1, 1]} : vector<2x18x256xf32> to vector<2x8x256xf32>
      %cst_37 = arith.constant 0.228960335 : f32
      %98 = vector.broadcast %cst_37 : f32 to vector<2x8x256xf32>
      %99 = arith.mulf %98, %97 : vector<2x8x256xf32>
      %100 = arith.addf %96, %99 : vector<2x8x256xf32>
      %101 = vector.extract_strided_slice %73 {offsets = [0, 7, 0], sizes = [2, 8, 256], strides = [1, 1, 1]} : vector<2x18x256xf32> to vector<2x8x256xf32>
      %cst_38 = arith.constant 0.0931082367 : f32
      %102 = vector.broadcast %cst_38 : f32 to vector<2x8x256xf32>
      %103 = arith.mulf %102, %101 : vector<2x8x256xf32>
      %104 = arith.addf %100, %103 : vector<2x8x256xf32>
      %105 = vector.extract_strided_slice %73 {offsets = [0, 8, 0], sizes = [2, 8, 256], strides = [1, 1, 1]} : vector<2x18x256xf32> to vector<2x8x256xf32>
      %cst_39 = arith.constant 0.0207428224 : f32
      %106 = vector.broadcast %cst_39 : f32 to vector<2x8x256xf32>
      %107 = arith.mulf %106, %105 : vector<2x8x256xf32>
      %108 = arith.addf %104, %107 : vector<2x8x256xf32>
      %109 = vector.extract_strided_slice %73 {offsets = [0, 9, 0], sizes = [2, 8, 256], strides = [1, 1, 1]} : vector<2x18x256xf32> to vector<2x8x256xf32>
      %cst_40 = arith.constant 0.00252517615 : f32
      %110 = vector.broadcast %cst_40 : f32 to vector<2x8x256xf32>
      %111 = arith.mulf %110, %109 : vector<2x8x256xf32>
      %112 = arith.addf %108, %111 : vector<2x8x256xf32>
      %113 = vector.extract_strided_slice %73 {offsets = [0, 10, 0], sizes = [2, 8, 256], strides = [1, 1, 1]} : vector<2x18x256xf32> to vector<2x8x256xf32>
      %cst_41 = arith.constant 1.67472535E-4 : f32
      %114 = vector.broadcast %cst_41 : f32 to vector<2x8x256xf32>
      %115 = arith.mulf %114, %113 : vector<2x8x256xf32>
      %116 = arith.addf %112, %115 : vector<2x8x256xf32>
      %cst_42 = arith.constant 0.000000e+00 : f32
      %117 = vector.broadcast %cst_42 : f32 to vector<2x4x256xf32>
      %118 = tpu.concatenate %117, %116, %117 in 1 : vector<2x4x256xf32>, vector<2x8x256xf32>, vector<2x4x256xf32> -> vector<2x16x256xf32>
      %119 = vector.extract_strided_slice %118 {offsets = [0, 0, 0], sizes = [2, 8, 256], strides = [1, 1, 1]} : vector<2x16x256xf32> to vector<2x8x256xf32>
      %cst_43 = arith.constant 7.12618711E-5 : f32
      %120 = vector.broadcast %cst_43 : f32 to vector<2x8x256xf32>
      %121 = arith.mulf %120, %119 : vector<2x8x256xf32>
      %122 = vector.extract_strided_slice %118 {offsets = [0, 1, 0], sizes = [2, 8, 256], strides = [1, 1, 1]} : vector<2x16x256xf32> to vector<2x8x256xf32>
      %cst_44 = arith.constant 0.0032349797 : f32
      %123 = vector.broadcast %cst_44 : f32 to vector<2x8x256xf32>
      %124 = arith.mulf %123, %122 : vector<2x8x256xf32>
      %125 = arith.addf %121, %124 : vector<2x8x256xf32>
      %126 = vector.extract_strided_slice %118 {offsets = [0, 2, 0], sizes = [2, 8, 256], strides = [1, 1, 1]} : vector<2x16x256xf32> to vector<2x8x256xf32>
      %cst_45 = arith.constant 0.0483050607 : f32
      %127 = vector.broadcast %cst_45 : f32 to vector<2x8x256xf32>
      %128 = arith.mulf %127, %126 : vector<2x8x256xf32>
      %129 = arith.addf %125, %128 : vector<2x8x256xf32>
      %130 = vector.extract_strided_slice %118 {offsets = [0, 3, 0], sizes = [2, 8, 256], strides = [1, 1, 1]} : vector<2x16x256xf32> to vector<2x8x256xf32>
      %cst_46 = arith.constant 0.241904616 : f32
      %131 = vector.broadcast %cst_46 : f32 to vector<2x8x256xf32>
      %132 = arith.mulf %131, %130 : vector<2x8x256xf32>
      %133 = arith.addf %129, %132 : vector<2x8x256xf32>
      %134 = vector.extract_strided_slice %118 {offsets = [0, 4, 0], sizes = [2, 8, 256], strides = [1, 1, 1]} : vector<2x16x256xf32> to vector<2x8x256xf32>
      %cst_47 = arith.constant 0.412967145 : f32
      %135 = vector.broadcast %cst_47 : f32 to vector<2x8x256xf32>
      %136 = arith.mulf %135, %134 : vector<2x8x256xf32>
      %137 = arith.addf %133, %136 : vector<2x8x256xf32>
      %138 = vector.extract_strided_slice %118 {offsets = [0, 5, 0], sizes = [2, 8, 256], strides = [1, 1, 1]} : vector<2x16x256xf32> to vector<2x8x256xf32>
      %cst_48 = arith.constant 0.241904616 : f32
      %139 = vector.broadcast %cst_48 : f32 to vector<2x8x256xf32>
      %140 = arith.mulf %139, %138 : vector<2x8x256xf32>
      %141 = arith.addf %137, %140 : vector<2x8x256xf32>
      %142 = vector.extract_strided_slice %118 {offsets = [0, 6, 0], sizes = [2, 8, 256], strides = [1, 1, 1]} : vector<2x16x256xf32> to vector<2x8x256xf32>
      %cst_49 = arith.constant 0.0483050607 : f32
      %143 = vector.broadcast %cst_49 : f32 to vector<2x8x256xf32>
      %144 = arith.mulf %143, %142 : vector<2x8x256xf32>
      %145 = arith.addf %141, %144 : vector<2x8x256xf32>
      %146 = vector.extract_strided_slice %118 {offsets = [0, 7, 0], sizes = [2, 8, 256], strides = [1, 1, 1]} : vector<2x16x256xf32> to vector<2x8x256xf32>
      %cst_50 = arith.constant 0.0032349797 : f32
      %147 = vector.broadcast %cst_50 : f32 to vector<2x8x256xf32>
      %148 = arith.mulf %147, %146 : vector<2x8x256xf32>
      %149 = arith.addf %145, %148 : vector<2x8x256xf32>
      %150 = vector.extract_strided_slice %118 {offsets = [0, 8, 0], sizes = [2, 8, 256], strides = [1, 1, 1]} : vector<2x16x256xf32> to vector<2x8x256xf32>
      %cst_51 = arith.constant 7.12618711E-5 : f32
      %151 = vector.broadcast %cst_51 : f32 to vector<2x8x256xf32>
      %152 = arith.mulf %151, %150 : vector<2x8x256xf32>
      %153 = arith.addf %149, %152 : vector<2x8x256xf32>
      %cst_52 = arith.constant 3.100000e+01 : f32
      %154 = vector.broadcast %cst_52 : f32 to vector<2x8x256xf32>
      %155 = arith.mulf %154, %71 : vector<2x8x256xf32>
      %cst_53 = arith.constant 3.000000e+01 : f32
      %156 = vector.broadcast %cst_53 : f32 to vector<2x8x256xf32>
      %157 = arith.mulf %156, %153 : vector<2x8x256xf32>
      %158 = arith.subf %155, %157 : vector<2x8x256xf32>
      %c0_54 = arith.constant 0 : index
      %c0_55 = arith.constant 0 : index
      %c0_56 = arith.constant 0 : index
      %c0_57 = arith.constant 0 : index
      %159 = vector.load %arg4[%c0_54, %c0_55, %c0_56, %c0_57] : memref<1x2x8x256xf32, #tpu.memory_space<vmem>>, vector<1x2x8x256xf32>
      %160 = vector.shape_cast %159 : vector<1x2x8x256xf32> to vector<2x8x256xf32>
      %161 = vector.shape_cast %158 : vector<2x8x256xf32> to vector<1x2x8x256xf32>
      tpu.vector_store %arg4[%c0_54, %c0_55, %c0_56, %c0_57], %161 {strides = array<i32>} : memref<1x2x8x256xf32, #tpu.memory_space<vmem>>, vector<1x2x8x256xf32>,
    } else {
    }
    %12 = arith.index_cast %arg0 : i32 to index
    %c2 = arith.constant 2 : index
    %13 = memref.load %arg1[%12, %c2] : memref<2x4xi32, #tpu.memory_space<smem>>
    %c1_i32_10 = arith.constant 1 : i32
    %14 = arith.cmpi eq, %13, %c1_i32_10 : i32
    %15 = arith.extui %14 : i1 to i32
    %c0_i32_11 = arith.constant 0 : i32
    %16 = arith.cmpi ne, %15, %c0_i32_11 : i32
    scf.if %16 {
      %c0_12 = arith.constant 0 : index
      %c0_13 = arith.constant 0 : index
      %c0_14 = arith.constant 0 : index
      %c0_15 = arith.constant 0 : index
      %17 = vector.load %arg4[%c0_12, %c0_13, %c0_14, %c0_15] : memref<1x2x8x256xf32, #tpu.memory_space<vmem>>, vector<1x2x8x256xf32>
      %18 = vector.shape_cast %17 : vector<1x2x8x256xf32> to vector<2x8x256xf32>
      %19 = vector.shape_cast %18 : vector<2x8x256xf32> to vector<1x2x8x256xf32>
      %cst = arith.constant dense<0x7F800000> : vector<1xf32>
      %20 = vector.multi_reduction <minimumf>, %19, %cst [1, 2, 3] : vector<1x2x8x256xf32> to vector<1xf32>
      %21 = vector.shape_cast %20 : vector<1xf32> to vector<1x1x1x1xf32>
      %22 = vector.extract %21[0, 0, 0, 0] : f32 from vector<1x1x1x1xf32>
      %23 = vector.broadcast %22 : f32 to vector<1x1x1xf32>
      %24 = vector.shape_cast %18 : vector<2x8x256xf32> to vector<1x2x8x256xf32>
      %cst_16 = arith.constant dense<0xFF800000> : vector<1xf32>
      %25 = vector.multi_reduction <maximumf>, %24, %cst_16 [1, 2, 3] : vector<1x2x8x256xf32> to vector<1xf32>
      %26 = vector.shape_cast %25 : vector<1xf32> to vector<1x1x1x1xf32>
      %27 = vector.extract %26[0, 0, 0, 0] : f32 from vector<1x1x1x1xf32>
      %28 = vector.broadcast %27 : f32 to vector<1x1x1xf32>
      %29 = arith.subf %28, %23 : vector<1x1x1xf32>
      %30 = vector.broadcast %23 : vector<1x1x1xf32> to vector<2x8x256xf32>
      %31 = arith.subf %18, %30 : vector<2x8x256xf32>
      %cst_17 = arith.constant 1.000000e-07 : f32
      %32 = vector.broadcast %cst_17 : f32 to vector<1x1x1xf32>
      %33 = arith.addf %29, %32 : vector<1x1x1xf32>
      %34 = vector.broadcast %33 : vector<1x1x1xf32> to vector<2x8x256xf32>
      %35 = arith.divf %31, %34 : vector<2x8x256xf32>
      %cst_18 = arith.constant 0.000000e+00 : f32
      %36 = vector.broadcast %cst_18 : f32 to vector<2x8x256xf32>
      %37 = arith.cmpf ogt, %35, %36 : vector<2x8x256xf32>
      %cst_19 = arith.constant 1.000000e-30 : f32
      %38 = vector.broadcast %cst_19 : f32 to vector<2x8x256xf32>
      %39 = arith.maximumf %35, %38 : vector<2x8x256xf32>
      %40 = math.log %39 : vector<2x8x256xf32>
      %cst_20 = arith.constant 1.08458352 : f32
      %41 = vector.broadcast %cst_20 : f32 to vector<2x8x256xf32>
      %42 = arith.mulf %41, %40 : vector<2x8x256xf32>
      %43 = math.exp %42 : vector<2x8x256xf32>
      %cst_21 = arith.constant 0.000000e+00 : f32
      %44 = vector.broadcast %cst_21 : f32 to vector<2x8x256xf32>
      %45 = arith.select %37, %43, %44 : vector<2x8x256xi1>, vector<2x8x256xf32>
      %46 = vector.broadcast %29 : vector<1x1x1xf32> to vector<2x8x256xf32>
      %47 = arith.mulf %45, %46 : vector<2x8x256xf32>
      %48 = vector.broadcast %23 : vector<1x1x1xf32> to vector<2x8x256xf32>
      %49 = arith.addf %47, %48 : vector<2x8x256xf32>
      %c0_22 = arith.constant 0 : index
      %c0_23 = arith.constant 0 : index
      %c0_24 = arith.constant 0 : index
      %c0_25 = arith.constant 0 : index
      %50 = vector.load %arg4[%c0_22, %c0_23, %c0_24, %c0_25] : memref<1x2x8x256xf32, #tpu.memory_space<vmem>>, vector<1x2x8x256xf32>
      %51 = vector.shape_cast %50 : vector<1x2x8x256xf32> to vector<2x8x256xf32>
      %52 = vector.shape_cast %49 : vector<2x8x256xf32> to vector<1x2x8x256xf32>
      tpu.vector_store %arg4[%c0_22, %c0_23, %c0_24, %c0_25], %52 {strides = array<i32>} : memref<1x2x8x256xf32, #tpu.memory_space<vmem>>, vector<1x2x8x256xf32>,
    } else {
    }
    return
  }
  func.func @transform_0(%arg0: i32, %arg1: memref<2x4xi32, #tpu.memory_space<smem>>) -> (i32, i32, i32, i32) {
    %c0_i32 = arith.constant 0 : i32
    %c0_i32_0 = arith.constant 0 : i32
    %c0_i32_1 = arith.constant 0 : i32
    %c0_i32_2 = arith.constant 0 : i32
    return %arg0, %c0_i32, %c0_i32_0, %c0_i32_1 : i32, i32, i32, i32
  }
  func.func @transform_1(%arg0: i32, %arg1: memref<2x4xi32, #tpu.memory_space<smem>>) -> (i32, i32) {
    %c0_i32 = arith.constant 0 : i32
    %c0_i32_0 = arith.constant 0 : i32
    %c0_i32_1 = arith.constant 0 : i32
    return %c0_i32, %c0_i32_0 : i32, i32
  }
  func.func @transform_2(%arg0: i32, %arg1: memref<2x4xi32, #tpu.memory_space<smem>>) -> (i32, i32, i32, i32) {
    %c0_i32 = arith.constant 0 : i32
    %c0_i32_0 = arith.constant 0 : i32
    %c0_i32_1 = arith.constant 0 : i32
    %c0_i32_2 = arith.constant 0 : i32
    return %arg0, %c0_i32, %c0_i32_0, %c0_i32_1 : i32, i32, i32, i32
  }
}

</mosaic_0001>

<llo_original>
// kernel: tpu_custom_call.1
$region0: #{tpu_custom_call.1}
  #allocation0 [shape = 'u32[]', space=smem, size = 0x4, offset = 0x4, fixed_abs, tag = 'smem constant byte address 0x4 - core index']
  #allocation1 [shape = 'u32[144,128]{1,0:T(1,128)}', space=vmem, size = 0x12000, scoped, tag = 'internal scratch']
  #allocation2 [shape = 's32[1]{0}', space=sflag, size = 0x4, scoped, tag = 'scoped memory for tpu_custom_call.1']
  #allocation3 [shape = 'u8[1024]{0}', space=smem, size = 0x400, scoped, tag = 'prefetched SMEM operand 0']
  %s0 = inlined_call_operand.hbm [shape: s32[2,4], index: 0, kind: input, shape index: {}]
  %s1 = inlined_call_operand.hbm [shape: f32[2,2,8,256], index: 1, kind: input, shape index: {}]
  %s2 = inlined_call_operand.hbm [shape: bf16[256,512], index: 2, kind: input, shape index: {}]
  %s3 = inlined_call_operand.hbm [shape: f32[2,2,8,256], index: 3, kind: output, shape index: {}]
  %s4 = sld [smem:[#allocation0]]
  $region61: #{tpu_custom_call.1} parent=0
    _
  %s6 = ssub.s32 1, %s4
  %s7 = scalar_select 0, %s6, %s4
  %9 = dma.hbm_to_smem %s0, 32, [#allocation3], [#allocation2]
  %10 = dma.done [#allocation2], 32
  %11 = sfence
  $region1: #{tpu_custom_call.1} parent=0
    #allocation4 [shape = 'u8[32768]{0}', space=vmem, size = 0x8000, scoped, tag = 'input window, operand 1']
    #allocation5 [shape = 's32[2]{0}', space=sflag, size = 0x8, scoped, tag = 'scoped memory for tpu_custom_call.1']
    #allocation6 [shape = 's32[2]{0}', space=sflag, size = 0x8, scoped, tag = 'scoped memory for tpu_custom_call.1']
    #allocation7 [shape = 'u8[262144]{0}', space=vmem, size = 0x40000, scoped, tag = 'input window, operand 2, single buffered']
    #allocation8 [shape = 's32[1]{0}', space=sflag, size = 0x4, scoped, tag = 'scoped memory for tpu_custom_call.1']
    #allocation9 [shape = 'u8[32768]{0}', space=vmem, size = 0x8000, scoped, tag = 'output window, operand 0']
    %12 = vsyncpa [#allocation5], 0
    %s13 = scalar_lea.sflag [#allocation5], 1
    %14 = vsyncpa %s13, 0
    %15 = vsyncpa [#allocation8], 0
    %16 = vsyncpa [#allocation6], 0
    %s17 = scalar_lea.sflag [#allocation6], 1
    %18 = vsyncpa %s17, 0
    loop: start=0, step=1, limit=4
    $region2: #{tpu_custom_call.1} parent=1 // loop_pre_header
      _
    $region3: #{tpu_custom_call.1} parent=1 // loop_header
      %s20 = sphi 0, %s24
      %p21 = scmp.ge.s32.totalorder %s20, 4
      %s30 = sphi 0, %s32
      %s33 = sphi 0, %s30
      %s34 = sphi 0, %s33
      %s50 = sphi 0, %s34
      %s54 = sphi 0, %s54
      %s56 = sphi 0, %s54
      %s57 = sphi 0, %s56
      %s71 = sphi 0, %s57
      %s77 = sphi 0, %s79
      %s80 = sphi 0, %s77
      %s81 = sphi 0, %s80
      %s97 = sphi 0, %s81
    $region4: #{tpu_custom_call.1} parent=1 // loop_header_branch
      %23 = sbr.rel (%p21) target = $region8
    $region5: #{tpu_custom_call.1} parent=1 // loop_body
      %s25 = ssub.s32 %s20, 1
      %s26 = ssub.s32 %s20, 2
      %s27 = sadd.s32 %s20, 1
      %s28 = ssub.s32 %s20, %s27
      %p29 = scmp.eq.s32.totalorder %s28, 0
      %s31 = sadd.s32 %s30, 1
      %s32 = scalar_select %p29, %s30, %s31
      %p35 = pneg %p29
      %p36 = scmp.eq.s32.totalorder %s20, 1
      %p37 = por %p35, %p36
      %p38 = scmp.ne.s32.totalorder %s30, %s33
      %p39 = scmp.eq.s32.totalorder %s20, 0
      %p40 = por %p38, %p39
      %p41 = scmp.ne.s32.totalorder %s30, %s33
      %p42 = scmp.eq.s32.totalorder %s25, 1
      %p43 = por %p41, %p42
      %p44 = scmp.ne.s32.totalorder %s33, %s34
      %p45 = scmp.eq.s32.totalorder %s25, 0
      %p46 = por %p44, %p45
      %p47 = scmp.ne.s32.totalorder %s33, %s34
      %p48 = scmp.eq.s32.totalorder %s26, 1
      %p49 = por %p47, %p48
      %p51 = scmp.ne.s32.totalorder %s34, %s50
      %p52 = scmp.eq.s32.totalorder %s26, 0
      %p53 = por %p51, %p52
      %s55 = sadd.s32 %s54, 1
      %p58 = scmp.eq.s32.totalorder %s20, 1
      %p59 = scmp.ne.s32.totalorder %s54, %s56
      %p60 = scmp.eq.s32.totalorder %s20, 0
      %p61 = por %p59, %p60
      %p62 = scmp.ne.s32.totalorder %s54, %s56
      %p63 = scmp.eq.s32.totalorder %s25, 1
      %p64 = por %p62, %p63
      %p65 = scmp.ne.s32.totalorder %s56, %s57
      %p66 = scmp.eq.s32.totalorder %s25, 0
      %p67 = por %p65, %p66
      %p68 = scmp.ne.s32.totalorder %s56, %s57
      %p69 = scmp.eq.s32.totalorder %s26, 1
      %p70 = por %p68, %p69
      %p72 = scmp.ne.s32.totalorder %s57, %s71
      %p73 = scmp.eq.s32.totalorder %s26, 0
      %p74 = por %p72, %p73
      %s75 = ssub.s32 %s20, %s27
      %p76 = scmp.eq.s32.totalorder %s75, 0
      %s78 = sadd.s32 %s77, 1
      %s79 = scalar_select %p76, %s77, %s78
      %p82 = pneg %p76
      %p83 = scmp.eq.s32.totalorder %s20, 1
      %p84 = por %p82, %p83
      %p85 = scmp.ne.s32.totalorder %s77, %s80
      %p86 = scmp.eq.s32.totalorder %s20, 0
      %p87 = por %p85, %p86
      %p88 = scmp.ne.s32.totalorder %s77, %s80
      %p89 = scmp.eq.s32.totalorder %s25, 1
      %p90 = por %p88, %p89
      %p91 = scmp.ne.s32.totalorder %s80, %s81
      %p92 = scmp.eq.s32.totalorder %s25, 0
      %p93 = por %p91, %p92
      %p94 = scmp.ne.s32.totalorder %s80, %s81
      %p95 = scmp.eq.s32.totalorder %s26, 1
      %p96 = por %p94, %p95
      %p98 = scmp.ne.s32.totalorder %s81, %s97
      %p99 = scmp.eq.s32.totalorder %s26, 0
      %p100 = por %p98, %p99
      %p101 = scmp.le.s32.totalorder 1, %s20
      %p102 = scmp.lt.s32.totalorder %s20, 3
      %p103 = pnand %p101, %p102
      %p104 = pneg %p103
      // Predicated region
      $region9: #{tpu_custom_call.1} parent=5 // pred_check
        _
      $region10: #{tpu_custom_call.1} parent=5 // pred_check_branch
        %106 = sbr.rel (%p103) target = $region12
      $region11: #{tpu_custom_call.1} parent=5 // pred_region
        %s107 = ssub.s32 %s20, 1
        // Predicated region
        $region13: #{tpu_custom_call.1} parent=11 // pred_check
          %p108 = pneg %p67
        $region14: #{tpu_custom_call.1} parent=11 // pred_check_branch
          %110 = sbr.rel (%p108) target = $region16
        $region15: #{tpu_custom_call.1} parent=11 // pred_region
          %s112 = ssub.s32 8192, 8192
          %113 = vsyncadd [#allocation8], %s112
          %s114 = sshll.u32 [#allocation7], 4
          %s115 = int_to_ptr.vmem [resolvable:$true] %s114
          %120 = dma.hbm_to_vmem [thread:$0]  %s2, 8192, %s115, [#allocation8], 256, 256, 16
        $region16: #{tpu_custom_call.1} parent=11 // pred_fallthru
          _
      $region12: #{tpu_custom_call.1} parent=5 // pred_fallthru
        _
      %p121 = scmp.lt.s32.totalorder %s20, 2
      // Predicated region
      $region17: #{tpu_custom_call.1} parent=5 // pred_check
        %p122 = pneg %p121
      $region18: #{tpu_custom_call.1} parent=5 // pred_check_branch
        %124 = sbr.rel (%p122) target = $region20
      $region19: #{tpu_custom_call.1} parent=5 // pred_region
        // Predicated region
        $region21: #{tpu_custom_call.1} parent=19 // pred_check
          %p125 = pneg %p40
        $region22: #{tpu_custom_call.1} parent=19 // pred_check_branch
          %127 = sbr.rel (%p125) target = $region24
        $region23: #{tpu_custom_call.1} parent=19 // pred_region
          %s128 = sand.u32 %s30, 1
          %s129 = scalar_lea.sflag [#allocation5], %s128
          %s130 = sand.u32 %s30, 1
          %s131 = smul.addr %s130, 32
          %s132 = scalar_lea.vmem [#allocation4], %s131
          %s134 = ssub.s32 512, 512
          %135 = vsyncadd %s129, %s134
          %s136 = smul.addr %s20, 4
          %s137 = smul.addr %s136, 128
          %s138 = scalar_lea.hbm %s1, %s137
          %s139 = sshll.u32 %s132, 4
          %s140 = int_to_ptr.vmem [resolvable:$true] %s139
          %145 = dma.hbm_to_vmem [thread:$0]  %s138, 512, %s140, %s129, 256, 256, 16
        $region24: #{tpu_custom_call.1} parent=19 // pred_fallthru
          _
      $region20: #{tpu_custom_call.1} parent=5 // pred_fallthru
        _
      %p146 = scmp.le.s32.totalorder 1, %s20
      %p147 = scmp.lt.s32.totalorder %s20, 3
      %p148 = pnand %p146, %p147
      %p149 = pneg %p148
      // Predicated region
      $region25: #{tpu_custom_call.1} parent=5 // pred_check
        _
      $region26: #{tpu_custom_call.1} parent=5 // pred_check_branch
        %151 = sbr.rel (%p148) target = $region28
      $region27: #{tpu_custom_call.1} parent=5 // pred_region
        %s152 = ssub.s32 %s20, 1
        %s153 = sand.u32 %s33, 1
        %s154 = scalar_lea.sflag [#allocation5], %s153
        %s155 = sand.u32 %s33, 1
        %s156 = smul.addr %s155, 32
        %s157 = scalar_lea.vmem [#allocation4], %s156
        // Predicated region
        $region29: #{tpu_custom_call.1} parent=27 // pred_check
          %p158 = pneg %p46
        $region30: #{tpu_custom_call.1} parent=27 // pred_check_branch
          %160 = sbr.rel (%p158) target = $region32
        $region31: #{tpu_custom_call.1} parent=27 // pred_region
          %161 = dma.done %s154, 512
        $region32: #{tpu_custom_call.1} parent=27 // pred_fallthru
          _
        // Predicated region
        $region33: #{tpu_custom_call.1} parent=27 // pred_check
          %p162 = pneg %p67
        $region34: #{tpu_custom_call.1} parent=27 // pred_check_branch
          %164 = sbr.rel (%p162) target = $region36
        $region35: #{tpu_custom_call.1} parent=27 // pred_region
          %165 = dma.done [#allocation8], 8192
        $region36: #{tpu_custom_call.1} parent=27 // pred_fallthru
          _
        %s166 = sand.u32 %s33, 1
        %s167 = scalar_lea.sflag [#allocation5], %s166
        %s168 = sand.u32 %s33, 1
        %s169 = smul.addr %s168, 32
        %s170 = scalar_lea.vmem [#allocation4], %s169
        %p171 = pneg %p46
        %p172 = pneg %p43
        %p173 = pneg %p67
        %p174 = pneg %p64
        %p175 = pneg %p93
        %p176 = pneg %p90
        %s177 = sand.u32 %s80, 1
        %s178 = scalar_lea.sflag [#allocation6], %s177
        %s179 = sand.u32 %s80, 1
        %s180 = smul.addr %s179, 32
        %s181 = scalar_lea.vmem [#allocation9], %s180
        %v182 = vld [vmem:[%s157] sm:$0xff]
        %v183 = vld [vmem:[%s157 + $0x8] sm:$0xff]
        %v184 = vld [vmem:[%s157 + $0x10] sm:$0xff]
        %v185 = vld [vmem:[%s157 + $0x18] sm:$0xff]
        %186 = vst [vmem:[%s181] sm:$0xff] %v182
        %187 = vst [vmem:[%s181 + $0x8] sm:$0xff] %v183
        %188 = vst [vmem:[%s181 + $0x10] sm:$0xff] %v184
        %189 = vst [vmem:[%s181 + $0x18] sm:$0xff] %v185
        %s190 = smul.u32 %s25, 128
        %s191 = sld [smem:[#allocation3 + %s190]]
        %p192 = scmp.eq.s32.totalorder %s191, 1
        // Predicated region
        $region37: #{tpu_custom_call.1} parent=27 // pred_check
          %p193 = pneg %p192
        $region38: #{tpu_custom_call.1} parent=27 // pred_check_branch
          %195 = sbr.rel (%p193) target = $region40
        $region39: #{tpu_custom_call.1} parent=27 // pred_region
          %s196 = sadd.s32 %s190, 3
          %s197 = sld [smem:[#allocation3 + %s196]]
          %v198 = vlaneseq
          %v199 = vshrl.u32 %v198, 7
          %v200 = vadd.s32 %v199, 8
          %v201 = vlaneseq
          %v202 = vand.u32 %v201, 127
          %v203 = vadd.s32 %v202, 128
          %v204 = vmul.u32 %v199, 256
          %v205 = vmul.u32 %v200, 256
          %v206 = vadd.s32 %v204, %v202
          %v207 = vadd.s32 %v204, %v203
          %v208 = vadd.s32 %v205, %v202
          %v209 = vadd.s32 %v205, %v203
          %s210 = smul.u32 %s197, 2654435769
          %v211 = vstv %s210
          %v212 = vadd.s32 %v206, %v211
          %v213 = vadd.s32 %v207, %v211
          %v214 = vadd.s32 %v208, %v211
          %v215 = vadd.s32 %v209, %v211
          %v216 = vshrl.u32 %v212, 16
          %v217 = vshrl.u32 %v213, 16
          %v218 = vshrl.u32 %v214, 16
          %v219 = vshrl.u32 %v215, 16
          %v220 = vxor.u32 %v212, %v216
          %v221 = vxor.u32 %v213, %v217
          %v222 = vxor.u32 %v214, %v218
          %v223 = vxor.u32 %v215, %v219
          %v224 = vmul.u32 %v220, 2146121005
          %v225 = vmul.u32 %v221, 2146121005
          %v226 = vmul.u32 %v222, 2146121005
          %v227 = vmul.u32 %v223, 2146121005
          %v228 = vshrl.u32 %v224, 15
          %v229 = vshrl.u32 %v225, 15
          %v230 = vshrl.u32 %v226, 15
          %v231 = vshrl.u32 %v227, 15
          %v232 = vxor.u32 %v224, %v228
          %v233 = vxor.u32 %v225, %v229
          %v234 = vxor.u32 %v226, %v230
          %v235 = vxor.u32 %v227, %v231
          %v236 = vmul.u32 %v232, 2221713035
          %v237 = vmul.u32 %v233, 2221713035
          %v238 = vmul.u32 %v234, 2221713035
          %v239 = vmul.u32 %v235, 2221713035
          %v240 = vshrl.u32 %v236, 16
          %v241 = vshrl.u32 %v237, 16
          %v242 = vshrl.u32 %v238, 16
          %v243 = vshrl.u32 %v239, 16
          %v244 = vxor.u32 %v236, %v240
          %v245 = vxor.u32 %v237, %v241
          %v246 = vxor.u32 %v238, %v242
          %v247 = vxor.u32 %v239, %v243
          %v248 = vshrl.u32 %v244, 8
          %v249 = vshrl.u32 %v245, 8
          %v250 = vshrl.u32 %v246, 8
          %v251 = vshrl.u32 %v247, 8
          %v252 = vcvt.s32.f32 %v248
          %v253 = vcvt.s32.f32 %v249
          %v254 = vcvt.s32.f32 %v250
          %v255 = vcvt.s32.f32 %v251
          %v256 = vmul.f32 %v252, 5.9604645e-08
          %v257 = vmul.f32 %v253, 5.9604645e-08
          %v258 = vmul.f32 %v254, 5.9604645e-08
          %v259 = vmul.f32 %v255, 5.9604645e-08
          %v260 = vadd.s32 %v212, 2246822519
          %v261 = vadd.s32 %v213, 2246822519
          %v262 = vadd.s32 %v214, 2246822519
          %v263 = vadd.s32 %v215, 2246822519
          %v264 = vshrl.u32 %v260, 16
          %v265 = vshrl.u32 %v261, 16
          %v266 = vshrl.u32 %v262, 16
          %v267 = vshrl.u32 %v263, 16
          %v268 = vxor.u32 %v260, %v264
          %v269 = vxor.u32 %v261, %v265
          %v270 = vxor.u32 %v262, %v266
          %v271 = vxor.u32 %v263, %v267
          %v272 = vmul.u32 %v268, 2146121005
          %v273 = vmul.u32 %v269, 2146121005
          %v274 = vmul.u32 %v270, 2146121005
          %v275 = vmul.u32 %v271, 2146121005
          %v276 = vshrl.u32 %v272, 15
          %v277 = vshrl.u32 %v273, 15
          %v278 = vshrl.u32 %v274, 15
          %v279 = vshrl.u32 %v275, 15
          %v280 = vxor.u32 %v272, %v276
          %v281 = vxor.u32 %v273, %v277
          %v282 = vxor.u32 %v274, %v278
          %v283 = vxor.u32 %v275, %v279
          %v284 = vmul.u32 %v280, 2221713035
          %v285 = vmul.u32 %v281, 2221713035
          %v286 = vmul.u32 %v282, 2221713035
          %v287 = vmul.u32 %v283, 2221713035
          %v288 = vshrl.u32 %v284, 16
          %v289 = vshrl.u32 %v285, 16
          %v290 = vshrl.u32 %v286, 16
          %v291 = vshrl.u32 %v287, 16
          %v292 = vxor.u32 %v284, %v288
          %v293 = vxor.u32 %v285, %v289
          %v294 = vxor.u32 %v286, %v290
          %v295 = vxor.u32 %v287, %v291
          %v296 = vshrl.u32 %v292, 8
          %v297 = vshrl.u32 %v293, 8
          %v298 = vshrl.u32 %v294, 8
          %v299 = vshrl.u32 %v295, 8
          %v300 = vcvt.s32.f32 %v296
          %v301 = vcvt.s32.f32 %v297
          %v302 = vcvt.s32.f32 %v298
          %v303 = vcvt.s32.f32 %v299
          %v304 = vmul.f32 %v300, 5.9604645e-08
          %v305 = vmul.f32 %v301, 5.9604645e-08
          %v306 = vmul.f32 %v302, 5.9604645e-08
          %v307 = vmul.f32 %v303, 5.9604645e-08
          %v308 = vadd.f32 %v256, %v304
          %v309 = vadd.f32 %v257, %v305
          %v310 = vadd.f32 %v258, %v306
          %v311 = vadd.f32 %v259, %v307
          %v312 = vadd.s32 %v212, 198677742
          %v313 = vadd.s32 %v213, 198677742
          %v314 = vadd.s32 %v214, 198677742
          %v315 = vadd.s32 %v215, 198677742
          %v316 = vshrl.u32 %v312, 16
          %v317 = vshrl.u32 %v313, 16
          %v318 = vshrl.u32 %v314, 16
          %v319 = vshrl.u32 %v315, 16
          %v320 = vxor.u32 %v312, %v316
          %v321 = vxor.u32 %v313, %v317
          %v322 = vxor.u32 %v314, %v318
          %v323 = vxor.u32 %v315, %v319
          %v324 = vmul.u32 %v320, 2146121005
          %v325 = vmul.u32 %v321, 2146121005
          %v326 = vmul.u32 %v322, 2146121005
          %v327 = vmul.u32 %v323, 2146121005
          %v328 = vshrl.u32 %v324, 15
          %v329 = vshrl.u32 %v325, 15
          %v330 = vshrl.u32 %v326, 15
          %v331 = vshrl.u32 %v327, 15
          %v332 = vxor.u32 %v324, %v328
          %v333 = vxor.u32 %v325, %v329
          %v334 = vxor.u32 %v326, %v330
          %v335 = vxor.u32 %v327, %v331
          %v336 = vmul.u32 %v332, 2221713035
          %v337 = vmul.u32 %v333, 2221713035
          %v338 = vmul.u32 %v334, 2221713035
          %v339 = vmul.u32 %v335, 2221713035
          %v340 = vshrl.u32 %v336, 16
          %v341 = vshrl.u32 %v337, 16
          %v342 = vshrl.u32 %v338, 16
          %v343 = vshrl.u32 %v339, 16
          %v344 = vxor.u32 %v336, %v340
          %v345 = vxor.u32 %v337, %v341
          %v346 = vxor.u32 %v338, %v342
          %v347 = vxor.u32 %v339, %v343
          %v348 = vshrl.u32 %v344, 8
          %v349 = vshrl.u32 %v345, 8
          %v350 = vshrl.u32 %v346, 8
          %v351 = vshrl.u32 %v347, 8
          %v352 = vcvt.s32.f32 %v348
          %v353 = vcvt.s32.f32 %v349
          %v354 = vcvt.s32.f32 %v350
          %v355 = vcvt.s32.f32 %v351
          %v356 = vmul.f32 %v352, 5.9604645e-08
          %v357 = vmul.f32 %v353, 5.9604645e-08
          %v358 = vmul.f32 %v354, 5.9604645e-08
          %v359 = vmul.f32 %v355, 5.9604645e-08
          %v360 = vadd.f32 %v308, %v356
          %v361 = vadd.f32 %v309, %v357
          %v362 = vadd.f32 %v310, %v358
          %v363 = vadd.f32 %v311, %v359
          %v364 = vadd.s32 %v212, 2445500261
          %v365 = vadd.s32 %v213, 2445500261
          %v366 = vadd.s32 %v214, 2445500261
          %v367 = vadd.s32 %v215, 2445500261
          %v368 = vshrl.u32 %v364, 16
          %v369 = vshrl.u32 %v365, 16
          %v370 = vshrl.u32 %v366, 16
          %v371 = vshrl.u32 %v367, 16
          %v372 = vxor.u32 %v364, %v368
          %v373 = vxor.u32 %v365, %v369
          %v374 = vxor.u32 %v366, %v370
          %v375 = vxor.u32 %v367, %v371
          %v376 = vmul.u32 %v372, 2146121005
          %v377 = vmul.u32 %v373, 2146121005
          %v378 = vmul.u32 %v374, 2146121005
          %v379 = vmul.u32 %v375, 2146121005
          %v380 = vshrl.u32 %v376, 15
          %v381 = vshrl.u32 %v377, 15
          %v382 = vshrl.u32 %v378, 15
          %v383 = vshrl.u32 %v379, 15
          %v384 = vxor.u32 %v376, %v380
          %v385 = vxor.u32 %v377, %v381
          %v386 = vxor.u32 %v378, %v382
          %v387 = vxor.u32 %v379, %v383
          %v388 = vmul.u32 %v384, 2221713035
          %v389 = vmul.u32 %v385, 2221713035
          %v390 = vmul.u32 %v386, 2221713035
          %v391 = vmul.u32 %v387, 2221713035
          %v392 = vshrl.u32 %v388, 16
          %v393 = vshrl.u32 %v389, 16
          %v394 = vshrl.u32 %v390, 16
          %v395 = vshrl.u32 %v391, 16
          %v396 = vxor.u32 %v388, %v392
          %v397 = vxor.u32 %v389, %v393
          %v398 = vxor.u32 %v390, %v394
          %v399 = vxor.u32 %v391, %v395
          %v400 = vshrl.u32 %v396, 8
          %v401 = vshrl.u32 %v397, 8
          %v402 = vshrl.u32 %v398, 8
          %v403 = vshrl.u32 %v399, 8
          %v404 = vcvt.s32.f32 %v400
          %v405 = vcvt.s32.f32 %v401
          %v406 = vcvt.s32.f32 %v402
          %v407 = vcvt.s32.f32 %v403
          %v408 = vmul.f32 %v404, 5.9604645e-08
          %v409 = vmul.f32 %v405, 5.9604645e-08
          %v410 = vmul.f32 %v406, 5.9604645e-08
          %v411 = vmul.f32 %v407, 5.9604645e-08
          %v412 = vadd.f32 %v360, %v408
          %v413 = vadd.f32 %v361, %v409
          %v414 = vadd.f32 %v362, %v410
          %v415 = vadd.f32 %v363, %v411
          %v416 = vadd.s32 %v212, 397355484
          %v417 = vadd.s32 %v213, 397355484
          %v418 = vadd.s32 %v214, 397355484
          %v419 = vadd.s32 %v215, 397355484
          %v420 = vshrl.u32 %v416, 16
          %v421 = vshrl.u32 %v417, 16
          %v422 = vshrl.u32 %v418, 16
          %v423 = vshrl.u32 %v419, 16
          %v424 = vxor.u32 %v416, %v420
          %v425 = vxor.u32 %v417, %v421
          %v426 = vxor.u32 %v418, %v422
          %v427 = vxor.u32 %v419, %v423
          %v428 = vmul.u32 %v424, 2146121005
          %v429 = vmul.u32 %v425, 2146121005
          %v430 = vmul.u32 %v426, 2146121005
          %v431 = vmul.u32 %v427, 2146121005
          %v432 = vshrl.u32 %v428, 15
          %v433 = vshrl.u32 %v429, 15
          %v434 = vshrl.u32 %v430, 15
          %v435 = vshrl.u32 %v431, 15
          %v436 = vxor.u32 %v428, %v432
          %v437 = vxor.u32 %v429, %v433
          %v438 = vxor.u32 %v430, %v434
          %v439 = vxor.u32 %v431, %v435
          %v440 = vmul.u32 %v436, 2221713035
          %v441 = vmul.u32 %v437, 2221713035
          %v442 = vmul.u32 %v438, 2221713035
          %v443 = vmul.u32 %v439, 2221713035
          %v444 = vshrl.u32 %v440, 16
          %v445 = vshrl.u32 %v441, 16
          %v446 = vshrl.u32 %v442, 16
          %v447 = vshrl.u32 %v443, 16
          %v448 = vxor.u32 %v440, %v444
          %v449 = vxor.u32 %v441, %v445
          %v450 = vxor.u32 %v442, %v446
          %v451 = vxor.u32 %v443, %v447
          %v452 = vshrl.u32 %v448, 8
          %v453 = vshrl.u32 %v449, 8
          %v454 = vshrl.u32 %v450, 8
          %v455 = vshrl.u32 %v451, 8
          %v456 = vcvt.s32.f32 %v452
          %v457 = vcvt.s32.f32 %v453
          %v458 = vcvt.s32.f32 %v454
          %v459 = vcvt.s32.f32 %v455
          %v460 = vmul.f32 %v456, 5.9604645e-08
          %v461 = vmul.f32 %v457, 5.9604645e-08
          %v462 = vmul.f32 %v458, 5.9604645e-08
          %v463 = vmul.f32 %v459, 5.9604645e-08
          %v464 = vadd.f32 %v412, %v460
          %v465 = vadd.f32 %v413, %v461
          %v466 = vadd.f32 %v414, %v462
          %v467 = vadd.f32 %v415, %v463
          %v468 = vadd.s32 %v212, 2644178003
          %v469 = vadd.s32 %v213, 2644178003
          %v470 = vadd.s32 %v214, 2644178003
          %v471 = vadd.s32 %v215, 2644178003
          %v472 = vshrl.u32 %v468, 16
          %v473 = vshrl.u32 %v469, 16
          %v474 = vshrl.u32 %v470, 16
          %v475 = vshrl.u32 %v471, 16
          %v476 = vxor.u32 %v468, %v472
          %v477 = vxor.u32 %v469, %v473
          %v478 = vxor.u32 %v470, %v474
          %v479 = vxor.u32 %v471, %v475
          %v480 = vmul.u32 %v476, 2146121005
          %v481 = vmul.u32 %v477, 2146121005
          %v482 = vmul.u32 %v478, 2146121005
          %v483 = vmul.u32 %v479, 2146121005
          %v484 = vshrl.u32 %v480, 15
          %v485 = vshrl.u32 %v481, 15
          %v486 = vshrl.u32 %v482, 15
          %v487 = vshrl.u32 %v483, 15
          %v488 = vxor.u32 %v480, %v484
          %v489 = vxor.u32 %v481, %v485
          %v490 = vxor.u32 %v482, %v486
          %v491 = vxor.u32 %v483, %v487
          %v492 = vmul.u32 %v488, 2221713035
          %v493 = vmul.u32 %v489, 2221713035
          %v494 = vmul.u32 %v490, 2221713035
          %v495 = vmul.u32 %v491, 2221713035
          %v496 = vshrl.u32 %v492, 16
          %v497 = vshrl.u32 %v493, 16
          %v498 = vshrl.u32 %v494, 16
          %v499 = vshrl.u32 %v495, 16
          %v500 = vxor.u32 %v492, %v496
          %v501 = vxor.u32 %v493, %v497
          %v502 = vxor.u32 %v494, %v498
          %v503 = vxor.u32 %v495, %v499
          %v504 = vshrl.u32 %v500, 8
          %v505 = vshrl.u32 %v501, 8
          %v506 = vshrl.u32 %v502, 8
          %v507 = vshrl.u32 %v503, 8
          %v508 = vcvt.s32.f32 %v504
          %v509 = vcvt.s32.f32 %v505
          %v510 = vcvt.s32.f32 %v506
          %v511 = vcvt.s32.f32 %v507
          %v512 = vmul.f32 %v508, 5.9604645e-08
          %v513 = vmul.f32 %v509, 5.9604645e-08
          %v514 = vmul.f32 %v510, 5.9604645e-08
          %v515 = vmul.f32 %v511, 5.9604645e-08
          %v516 = vadd.f32 %v464, %v512
          %v517 = vadd.f32 %v465, %v513
          %v518 = vadd.f32 %v466, %v514
          %v519 = vadd.f32 %v467, %v515
          %v520 = vadd.s32 %v212, 596033226
          %v521 = vadd.s32 %v213, 596033226
          %v522 = vadd.s32 %v214, 596033226
          %v523 = vadd.s32 %v215, 596033226
          %v524 = vshrl.u32 %v520, 16
          %v525 = vshrl.u32 %v521, 16
          %v526 = vshrl.u32 %v522, 16
          %v527 = vshrl.u32 %v523, 16
          %v528 = vxor.u32 %v520, %v524
          %v529 = vxor.u32 %v521, %v525
          %v530 = vxor.u32 %v522, %v526
          %v531 = vxor.u32 %v523, %v527
          %v532 = vmul.u32 %v528, 2146121005
          %v533 = vmul.u32 %v529, 2146121005
          %v534 = vmul.u32 %v530, 2146121005
          %v535 = vmul.u32 %v531, 2146121005
          %v536 = vshrl.u32 %v532, 15
          %v537 = vshrl.u32 %v533, 15
          %v538 = vshrl.u32 %v534, 15
          %v539 = vshrl.u32 %v535, 15
          %v540 = vxor.u32 %v532, %v536
          %v541 = vxor.u32 %v533, %v537
          %v542 = vxor.u32 %v534, %v538
          %v543 = vxor.u32 %v535, %v539
          %v544 = vmul.u32 %v540, 2221713035
          %v545 = vmul.u32 %v541, 2221713035
          %v546 = vmul.u32 %v542, 2221713035
          %v547 = vmul.u32 %v543, 2221713035
          %v548 = vshrl.u32 %v544, 16
          %v549 = vshrl.u32 %v545, 16
          %v550 = vshrl.u32 %v546, 16
          %v551 = vshrl.u32 %v547, 16
          %v552 = vxor.u32 %v544, %v548
          %v553 = vxor.u32 %v545, %v549
          %v554 = vxor.u32 %v546, %v550
          %v555 = vxor.u32 %v547, %v551
          %v556 = vshrl.u32 %v552, 8
          %v557 = vshrl.u32 %v553, 8
          %v558 = vshrl.u32 %v554, 8
          %v559 = vshrl.u32 %v555, 8
          %v560 = vcvt.s32.f32 %v556
          %v561 = vcvt.s32.f32 %v557
          %v562 = vcvt.s32.f32 %v558
          %v563 = vcvt.s32.f32 %v559
          %v564 = vmul.f32 %v560, 5.9604645e-08
          %v565 = vmul.f32 %v561, 5.9604645e-08
          %v566 = vmul.f32 %v562, 5.9604645e-08
          %v567 = vmul.f32 %v563, 5.9604645e-08
          %v568 = vadd.f32 %v516, %v564
          %v569 = vadd.f32 %v517, %v565
          %v570 = vadd.f32 %v518, %v566
          %v571 = vadd.f32 %v519, %v567
          %v572 = vadd.s32 %v212, 2842855745
          %v573 = vadd.s32 %v213, 2842855745
          %v574 = vadd.s32 %v214, 2842855745
          %v575 = vadd.s32 %v215, 2842855745
          %v576 = vshrl.u32 %v572, 16
          %v577 = vshrl.u32 %v573, 16
          %v578 = vshrl.u32 %v574, 16
          %v579 = vshrl.u32 %v575, 16
          %v580 = vxor.u32 %v572, %v576
          %v581 = vxor.u32 %v573, %v577
          %v582 = vxor.u32 %v574, %v578
          %v583 = vxor.u32 %v575, %v579
          %v584 = vmul.u32 %v580, 2146121005
          %v585 = vmul.u32 %v581, 2146121005
          %v586 = vmul.u32 %v582, 2146121005
          %v587 = vmul.u32 %v583, 2146121005
          %v588 = vshrl.u32 %v584, 15
          %v589 = vshrl.u32 %v585, 15
          %v590 = vshrl.u32 %v586, 15
          %v591 = vshrl.u32 %v587, 15
          %v592 = vxor.u32 %v584, %v588
          %v593 = vxor.u32 %v585, %v589
          %v594 = vxor.u32 %v586, %v590
          %v595 = vxor.u32 %v587, %v591
          %v596 = vmul.u32 %v592, 2221713035
          %v597 = vmul.u32 %v593, 2221713035
          %v598 = vmul.u32 %v594, 2221713035
          %v599 = vmul.u32 %v595, 2221713035
          %v600 = vshrl.u32 %v596, 16
          %v601 = vshrl.u32 %v597, 16
          %v602 = vshrl.u32 %v598, 16
          %v603 = vshrl.u32 %v599, 16
          %v604 = vxor.u32 %v596, %v600
          %v605 = vxor.u32 %v597, %v601
          %v606 = vxor.u32 %v598, %v602
          %v607 = vxor.u32 %v599, %v603
          %v608 = vshrl.u32 %v604, 8
          %v609 = vshrl.u32 %v605, 8
          %v610 = vshrl.u32 %v606, 8
          %v611 = vshrl.u32 %v607, 8
          %v612 = vcvt.s32.f32 %v608
          %v613 = vcvt.s32.f32 %v609
          %v614 = vcvt.s32.f32 %v610
          %v615 = vcvt.s32.f32 %v611
          %v616 = vmul.f32 %v612, 5.9604645e-08
          %v617 = vmul.f32 %v613, 5.9604645e-08
          %v618 = vmul.f32 %v614, 5.9604645e-08
          %v619 = vmul.f32 %v615, 5.9604645e-08
          %v620 = vadd.f32 %v568, %v616
          %v621 = vadd.f32 %v569, %v617
          %v622 = vadd.f32 %v570, %v618
          %v623 = vadd.f32 %v571, %v619
          %v624 = vadd.s32 %v212, 794710968
          %v625 = vadd.s32 %v213, 794710968
          %v626 = vadd.s32 %v214, 794710968
          %v627 = vadd.s32 %v215, 794710968
          %v628 = vshrl.u32 %v624, 16
          %v629 = vshrl.u32 %v625, 16
          %v630 = vshrl.u32 %v626, 16
          %v631 = vshrl.u32 %v627, 16
          %v632 = vxor.u32 %v624, %v628
          %v633 = vxor.u32 %v625, %v629
          %v634 = vxor.u32 %v626, %v630
          %v635 = vxor.u32 %v627, %v631
          %v636 = vmul.u32 %v632, 2146121005
          %v637 = vmul.u32 %v633, 2146121005
          %v638 = vmul.u32 %v634, 2146121005
          %v639 = vmul.u32 %v635, 2146121005
          %v640 = vshrl.u32 %v636, 15
          %v641 = vshrl.u32 %v637, 15
          %v642 = vshrl.u32 %v638, 15
          %v643 = vshrl.u32 %v639, 15
          %v644 = vxor.u32 %v636, %v640
          %v645 = vxor.u32 %v637, %v641
          %v646 = vxor.u32 %v638, %v642
          %v647 = vxor.u32 %v639, %v643
          %v648 = vmul.u32 %v644, 2221713035
          %v649 = vmul.u32 %v645, 2221713035
          %v650 = vmul.u32 %v646, 2221713035
          %v651 = vmul.u32 %v647, 2221713035
          %v652 = vshrl.u32 %v648, 16
          %v653 = vshrl.u32 %v649, 16
          %v654 = vshrl.u32 %v650, 16
          %v655 = vshrl.u32 %v651, 16
          %v656 = vxor.u32 %v648, %v652
          %v657 = vxor.u32 %v649, %v653
          %v658 = vxor.u32 %v650, %v654
          %v659 = vxor.u32 %v651, %v655
          %v660 = vshrl.u32 %v656, 8
          %v661 = vshrl.u32 %v657, 8
          %v662 = vshrl.u32 %v658, 8
          %v663 = vshrl.u32 %v659, 8
          %v664 = vcvt.s32.f32 %v660
          %v665 = vcvt.s32.f32 %v661
          %v666 = vcvt.s32.f32 %v662
          %v667 = vcvt.s32.f32 %v663
          %v668 = vmul.f32 %v664, 5.9604645e-08
          %v669 = vmul.f32 %v665, 5.9604645e-08
          %v670 = vmul.f32 %v666, 5.9604645e-08
          %v671 = vmul.f32 %v667, 5.9604645e-08
          %v672 = vadd.f32 %v620, %v668
          %v673 = vadd.f32 %v621, %v669
          %v674 = vadd.f32 %v622, %v670
          %v675 = vadd.f32 %v623, %v671
          %v676 = vadd.s32 %v212, 3041533487
          %v677 = vadd.s32 %v213, 3041533487
          %v678 = vadd.s32 %v214, 3041533487
          %v679 = vadd.s32 %v215, 3041533487
          %v680 = vshrl.u32 %v676, 16
          %v681 = vshrl.u32 %v677, 16
          %v682 = vshrl.u32 %v678, 16
          %v683 = vshrl.u32 %v679, 16
          %v684 = vxor.u32 %v676, %v680
          %v685 = vxor.u32 %v677, %v681
          %v686 = vxor.u32 %v678, %v682
          %v687 = vxor.u32 %v679, %v683
          %v688 = vmul.u32 %v684, 2146121005
          %v689 = vmul.u32 %v685, 2146121005
          %v690 = vmul.u32 %v686, 2146121005
          %v691 = vmul.u32 %v687, 2146121005
          %v692 = vshrl.u32 %v688, 15
          %v693 = vshrl.u32 %v689, 15
          %v694 = vshrl.u32 %v690, 15
          %v695 = vshrl.u32 %v691, 15
          %v696 = vxor.u32 %v688, %v692
          %v697 = vxor.u32 %v689, %v693
          %v698 = vxor.u32 %v690, %v694
          %v699 = vxor.u32 %v691, %v695
          %v700 = vmul.u32 %v696, 2221713035
          %v701 = vmul.u32 %v697, 2221713035
          %v702 = vmul.u32 %v698, 2221713035
          %v703 = vmul.u32 %v699, 2221713035
          %v704 = vshrl.u32 %v700, 16
          %v705 = vshrl.u32 %v701, 16
          %v706 = vshrl.u32 %v702, 16
          %v707 = vshrl.u32 %v703, 16
          %v708 = vxor.u32 %v700, %v704
          %v709 = vxor.u32 %v701, %v705
          %v710 = vxor.u32 %v702, %v706
          %v711 = vxor.u32 %v703, %v707
          %v712 = vshrl.u32 %v708, 8
          %v713 = vshrl.u32 %v709, 8
          %v714 = vshrl.u32 %v710, 8
          %v715 = vshrl.u32 %v711, 8
          %v716 = vcvt.s32.f32 %v712
          %v717 = vcvt.s32.f32 %v713
          %v718 = vcvt.s32.f32 %v714
          %v719 = vcvt.s32.f32 %v715
          %v720 = vmul.f32 %v716, 5.9604645e-08
          %v721 = vmul.f32 %v717, 5.9604645e-08
          %v722 = vmul.f32 %v718, 5.9604645e-08
          %v723 = vmul.f32 %v719, 5.9604645e-08
          %v724 = vadd.f32 %v672, %v720
          %v725 = vadd.f32 %v673, %v721
          %v726 = vadd.f32 %v674, %v722
          %v727 = vadd.f32 %v675, %v723
          %v728 = vadd.s32 %v212, 993388710
          %v729 = vadd.s32 %v213, 993388710
          %v730 = vadd.s32 %v214, 993388710
          %v731 = vadd.s32 %v215, 993388710
          %v732 = vshrl.u32 %v728, 16
          %v733 = vshrl.u32 %v729, 16
          %v734 = vshrl.u32 %v730, 16
          %v735 = vshrl.u32 %v731, 16
          %v736 = vxor.u32 %v728, %v732
          %v737 = vxor.u32 %v729, %v733
          %v738 = vxor.u32 %v730, %v734
          %v739 = vxor.u32 %v731, %v735
          %v740 = vmul.u32 %v736, 2146121005
          %v741 = vmul.u32 %v737, 2146121005
          %v742 = vmul.u32 %v738, 2146121005
          %v743 = vmul.u32 %v739, 2146121005
          %v744 = vshrl.u32 %v740, 15
          %v745 = vshrl.u32 %v741, 15
          %v746 = vshrl.u32 %v742, 15
          %v747 = vshrl.u32 %v743, 15
          %v748 = vxor.u32 %v740, %v744
          %v749 = vxor.u32 %v741, %v745
          %v750 = vxor.u32 %v742, %v746
          %v751 = vxor.u32 %v743, %v747
          %v752 = vmul.u32 %v748, 2221713035
          %v753 = vmul.u32 %v749, 2221713035
          %v754 = vmul.u32 %v750, 2221713035
          %v755 = vmul.u32 %v751, 2221713035
          %v756 = vshrl.u32 %v752, 16
          %v757 = vshrl.u32 %v753, 16
          %v758 = vshrl.u32 %v754, 16
          %v759 = vshrl.u32 %v755, 16
          %v760 = vxor.u32 %v752, %v756
          %v761 = vxor.u32 %v753, %v757
          %v762 = vxor.u32 %v754, %v758
          %v763 = vxor.u32 %v755, %v759
          %v764 = vshrl.u32 %v760, 8
          %v765 = vshrl.u32 %v761, 8
          %v766 = vshrl.u32 %v762, 8
          %v767 = vshrl.u32 %v763, 8
          %v768 = vcvt.s32.f32 %v764
          %v769 = vcvt.s32.f32 %v765
          %v770 = vcvt.s32.f32 %v766
          %v771 = vcvt.s32.f32 %v767
          %v772 = vmul.f32 %v768, 5.9604645e-08
          %v773 = vmul.f32 %v769, 5.9604645e-08
          %v774 = vmul.f32 %v770, 5.9604645e-08
          %v775 = vmul.f32 %v771, 5.9604645e-08
          %v776 = vadd.f32 %v724, %v772
          %v777 = vadd.f32 %v725, %v773
          %v778 = vadd.f32 %v726, %v774
          %v779 = vadd.f32 %v727, %v775
          %v780 = vadd.s32 %v212, 3240211229
          %v781 = vadd.s32 %v213, 3240211229
          %v782 = vadd.s32 %v214, 3240211229
          %v783 = vadd.s32 %v215, 3240211229
          %v784 = vshrl.u32 %v780, 16
          %v785 = vshrl.u32 %v781, 16
          %v786 = vshrl.u32 %v782, 16
          %v787 = vshrl.u32 %v783, 16
          %v788 = vxor.u32 %v780, %v784
          %v789 = vxor.u32 %v781, %v785
          %v790 = vxor.u32 %v782, %v786
          %v791 = vxor.u32 %v783, %v787
          %v792 = vmul.u32 %v788, 2146121005
          %v793 = vmul.u32 %v789, 2146121005
          %v794 = vmul.u32 %v790, 2146121005
          %v795 = vmul.u32 %v791, 2146121005
          %v796 = vshrl.u32 %v792, 15
          %v797 = vshrl.u32 %v793, 15
          %v798 = vshrl.u32 %v794, 15
          %v799 = vshrl.u32 %v795, 15
          %v800 = vxor.u32 %v792, %v796
          %v801 = vxor.u32 %v793, %v797
          %v802 = vxor.u32 %v794, %v798
          %v803 = vxor.u32 %v795, %v799
          %v804 = vmul.u32 %v800, 2221713035
          %v805 = vmul.u32 %v801, 2221713035
          %v806 = vmul.u32 %v802, 2221713035
          %v807 = vmul.u32 %v803, 2221713035
          %v808 = vshrl.u32 %v804, 16
          %v809 = vshrl.u32 %v805, 16
          %v810 = vshrl.u32 %v806, 16
          %v811 = vshrl.u32 %v807, 16
          %v812 = vxor.u32 %v804, %v808
          %v813 = vxor.u32 %v805, %v809
          %v814 = vxor.u32 %v806, %v810
          %v815 = vxor.u32 %v807, %v811
          %v816 = vshrl.u32 %v812, 8
          %v817 = vshrl.u32 %v813, 8
          %v818 = vshrl.u32 %v814, 8
          %v819 = vshrl.u32 %v815, 8
          %v820 = vcvt.s32.f32 %v816
          %v821 = vcvt.s32.f32 %v817
          %v822 = vcvt.s32.f32 %v818
          %v823 = vcvt.s32.f32 %v819
          %v824 = vmul.f32 %v820, 5.9604645e-08
          %v825 = vmul.f32 %v821, 5.9604645e-08
          %v826 = vmul.f32 %v822, 5.9604645e-08
          %v827 = vmul.f32 %v823, 5.9604645e-08
          %v828 = vadd.f32 %v776, %v824
          %v829 = vadd.f32 %v777, %v825
          %v830 = vadd.f32 %v778, %v826
          %v831 = vadd.f32 %v779, %v827
          %v832 = vsub.f32 %v828, 6.0
          %v833 = vsub.f32 %v829, 6.0
          %v834 = vsub.f32 %v830, 6.0
          %v835 = vsub.f32 %v831, 6.0
          %v836 = vld [vmem:[%s181] sm:$0xff]
          %v837 = vld [vmem:[%s181 + $0x8] sm:$0xff]
          %v838 = vld [vmem:[%s181 + $0x10] sm:$0xff]
          %v839 = vld [vmem:[%s181 + $0x18] sm:$0xff]
          %v840 = vmul.f32 %v832, 0.08544253
          %v841 = vmul.f32 %v833, 0.08544253
          %v842 = vmul.f32 %v834, 0.08544253
          %v843 = vmul.f32 %v835, 0.08544253
          %v844 = vadd.f32 %v836, %v840
          %v845 = vadd.f32 %v837, %v841
          %v846 = vadd.f32 %v838, %v842
          %v847 = vadd.f32 %v839, %v843
          %848 = vst [vmem:[%s181] sm:$0xff] %v844
          %849 = vst [vmem:[%s181 + $0x8] sm:$0xff] %v845
          %850 = vst [vmem:[%s181 + $0x10] sm:$0xff] %v846
          %851 = vst [vmem:[%s181 + $0x18] sm:$0xff] %v847
        $region40: #{tpu_custom_call.1} parent=27 // pred_fallthru
          _
        %s852 = sadd.s32 %s190, 1
        %s853 = sld [smem:[#allocation3 + %s852]]
        %p854 = scmp.eq.s32.totalorder %s853, 1
        // Predicated region
        $region41: #{tpu_custom_call.1} parent=27 // pred_check
          %p855 = pneg %p854
        $region42: #{tpu_custom_call.1} parent=27 // pred_check_branch
          %857 = sbr.rel (%p855) target = $region44
        $region43: #{tpu_custom_call.1} parent=27 // pred_region
          %v858 = vld [vmem:[%s181] sm:$0xff]
          %v859 = vld [vmem:[%s181 + $0x8] sm:$0xff]
          %v860 = vld [vmem:[%s181 + $0x10] sm:$0xff]
          %v861 = vld [vmem:[%s181 + $0x18] sm:$0xff]
          %v862 = vpack.c.bf16 %v860, %v858
          %v863 = vpack.c.bf16 %v861, %v859
          %v864 = vld [vmem:[#allocation7] sm:$0xff]
          %v865 = vld [vmem:[#allocation7 + $0x8] sm:$0xff]
          %v866 = vld [vmem:[#allocation7 + $0x10] sm:$0xff]
          %v867 = vld [vmem:[#allocation7 + $0x18] sm:$0xff]
          %v868 = vld [vmem:[#allocation7 + $0x20] sm:$0xff]
          %v869 = vld [vmem:[#allocation7 + $0x28] sm:$0xff]
          %v870 = vld [vmem:[#allocation7 + $0x30] sm:$0xff]
          %v871 = vld [vmem:[#allocation7 + $0x38] sm:$0xff]
          %v872 = vld [vmem:[#allocation7 + $0x40] sm:$0xff]
          %v873 = vld [vmem:[#allocation7 + $0x48] sm:$0xff]
          %v874 = vld [vmem:[#allocation7 + $0x50] sm:$0xff]
          %v875 = vld [vmem:[#allocation7 + $0x58] sm:$0xff]
          %v876 = vld [vmem:[#allocation7 + $0x60] sm:$0xff]
          %v877 = vld [vmem:[#allocation7 + $0x68] sm:$0xff]
          %v878 = vld [vmem:[#allocation7 + $0x70] sm:$0xff]
          %v879 = vld [vmem:[#allocation7 + $0x78] sm:$0xff]
          %v880 = vld [vmem:[#allocation7 + $0x80] sm:$0xff]
          %v881 = vld [vmem:[#allocation7 + $0x88] sm:$0xff]
          %v882 = vld [vmem:[#allocation7 + $0x90] sm:$0xff]
          %v883 = vld [vmem:[#allocation7 + $0x98] sm:$0xff]
          %v884 = vld [vmem:[#allocation7 + $0xa0] sm:$0xff]
          %v885 = vld [vmem:[#allocation7 + $0xa8] sm:$0xff]
          %v886 = vld [vmem:[#allocation7 + $0xb0] sm:$0xff]
          %v887 = vld [vmem:[#allocation7 + $0xb8] sm:$0xff]
          %v888 = vld [vmem:[#allocation7 + $0xc0] sm:$0xff]
          %v889 = vld [vmem:[#allocation7 + $0xc8] sm:$0xff]
          %v890 = vld [vmem:[#allocation7 + $0xd0] sm:$0xff]
          %v891 = vld [vmem:[#allocation7 + $0xd8] sm:$0xff]
          %v892 = vld [vmem:[#allocation7 + $0xe0] sm:$0xff]
          %v893 = vld [vmem:[#allocation7 + $0xe8] sm:$0xff]
          %v894 = vld [vmem:[#allocation7 + $0xf0] sm:$0xff]
          %v895 = vld [vmem:[#allocation7 + $0xf8] sm:$0xff]
          %v896 = vld [vmem:[#allocation7 + $0x100] sm:$0xff]
          %v897 = vld [vmem:[#allocation7 + $0x108] sm:$0xff]
          %v898 = vld [vmem:[#allocation7 + $0x110] sm:$0xff]
          %v899 = vld [vmem:[#allocation7 + $0x118] sm:$0xff]
          %v900 = vld [vmem:[#allocation7 + $0x120] sm:$0xff]
          %v901 = vld [vmem:[#allocation7 + $0x128] sm:$0xff]
          %v902 = vld [vmem:[#allocation7 + $0x130] sm:$0xff]
          %v903 = vld [vmem:[#allocation7 + $0x138] sm:$0xff]
          %v904 = vld [vmem:[#allocation7 + $0x140] sm:$0xff]
          %v905 = vld [vmem:[#allocation7 + $0x148] sm:$0xff]
          %v906 = vld [vmem:[#allocation7 + $0x150] sm:$0xff]
          %v907 = vld [vmem:[#allocation7 + $0x158] sm:$0xff]
          %v908 = vld [vmem:[#allocation7 + $0x160] sm:$0xff]
          %v909 = vld [vmem:[#allocation7 + $0x168] sm:$0xff]
          %v910 = vld [vmem:[#allocation7 + $0x170] sm:$0xff]
          %v911 = vld [vmem:[#allocation7 + $0x178] sm:$0xff]
          %v912 = vld [vmem:[#allocation7 + $0x180] sm:$0xff]
          %v913 = vld [vmem:[#allocation7 + $0x188] sm:$0xff]
          %v914 = vld [vmem:[#allocation7 + $0x190] sm:$0xff]
          %v915 = vld [vmem:[#allocation7 + $0x198] sm:$0xff]
          %v916 = vld [vmem:[#allocation7 + $0x1a0] sm:$0xff]
          %v917 = vld [vmem:[#allocation7 + $0x1a8] sm:$0xff]
          %v918 = vld [vmem:[#allocation7 + $0x1b0] sm:$0xff]
          %v919 = vld [vmem:[#allocation7 + $0x1b8] sm:$0xff]
          %v920 = vld [vmem:[#allocation7 + $0x1c0] sm:$0xff]
          %v921 = vld [vmem:[#allocation7 + $0x1c8] sm:$0xff]
          %v922 = vld [vmem:[#allocation7 + $0x1d0] sm:$0xff]
          %v923 = vld [vmem:[#allocation7 + $0x1d8] sm:$0xff]
          %v924 = vld [vmem:[#allocation7 + $0x1e0] sm:$0xff]
          %v925 = vld [vmem:[#allocation7 + $0x1e8] sm:$0xff]
          %v926 = vld [vmem:[#allocation7 + $0x1f0] sm:$0xff]
          %v927 = vld [vmem:[#allocation7 + $0x1f8] sm:$0xff]
          %v992 = vunpack.c.l.b16 %v864
          %v993 = vunpack.c.h.b16 %v864
          %v994 = vunpack.c.l.b16 %v865
          %v995 = vunpack.c.h.b16 %v865
          %v996 = vunpack.c.l.b16 %v866
          %v997 = vunpack.c.h.b16 %v866
          %v998 = vunpack.c.l.b16 %v867
          %v999 = vunpack.c.h.b16 %v867
          %v1000 = vunpack.c.l.b16 %v868
          %v1001 = vunpack.c.h.b16 %v868
          %v1002 = vunpack.c.l.b16 %v869
          %v1003 = vunpack.c.h.b16 %v869
          %v1004 = vunpack.c.l.b16 %v870
          %v1005 = vunpack.c.h.b16 %v870
          %v1006 = vunpack.c.l.b16 %v871
          %v1007 = vunpack.c.h.b16 %v871
          %v1008 = vunpack.c.l.b16 %v872
          %v1009 = vunpack.c.h.b16 %v872
          %v1010 = vunpack.c.l.b16 %v873
          %v1011 = vunpack.c.h.b16 %v873
          %v1012 = vunpack.c.l.b16 %v874
          %v1013 = vunpack.c.h.b16 %v874
          %v1014 = vunpack.c.l.b16 %v875
          %v1015 = vunpack.c.h.b16 %v875
          %v1016 = vunpack.c.l.b16 %v876
          %v1017 = vunpack.c.h.b16 %v876
          %v1018 = vunpack.c.l.b16 %v877
          %v1019 = vunpack.c.h.b16 %v877
          %v1020 = vunpack.c.l.b16 %v878
          %v1021 = vunpack.c.h.b16 %v878
          %v1022 = vunpack.c.l.b16 %v879
          %v1023 = vunpack.c.h.b16 %v879
          %v1024 = vunpack.c.l.b16 %v880
          %v1025 = vunpack.c.h.b16 %v880
          %v1026 = vunpack.c.l.b16 %v881
          %v1027 = vunpack.c.h.b16 %v881
          %v1028 = vunpack.c.l.b16 %v882
          %v1029 = vunpack.c.h.b16 %v882
          %v1030 = vunpack.c.l.b16 %v883
          %v1031 = vunpack.c.h.b16 %v883
          %v1032 = vunpack.c.l.b16 %v884
          %v1033 = vunpack.c.h.b16 %v884
          %v1034 = vunpack.c.l.b16 %v885
          %v1035 = vunpack.c.h.b16 %v885
          %v1036 = vunpack.c.l.b16 %v886
          %v1037 = vunpack.c.h.b16 %v886
          %v1038 = vunpack.c.l.b16 %v887
          %v1039 = vunpack.c.h.b16 %v887
          %v1040 = vunpack.c.l.b16 %v888
          %v1041 = vunpack.c.h.b16 %v888
          %v1042 = vunpack.c.l.b16 %v889
          %v1043 = vunpack.c.h.b16 %v889
          %v1044 = vunpack.c.l.b16 %v890
          %v1045 = vunpack.c.h.b16 %v890
          %v1046 = vunpack.c.l.b16 %v891
          %v1047 = vunpack.c.h.b16 %v891
          %v1048 = vunpack.c.l.b16 %v892
          %v1049 = vunpack.c.h.b16 %v892
          %v1050 = vunpack.c.l.b16 %v893
          %v1051 = vunpack.c.h.b16 %v893
          %v1052 = vunpack.c.l.b16 %v894
          %v1053 = vunpack.c.h.b16 %v894
          %v1054 = vunpack.c.l.b16 %v895
          %v1055 = vunpack.c.h.b16 %v895
          %v1056 = vunpack.c.l.b16 %v896
          %v1057 = vunpack.c.h.b16 %v896
          %v1058 = vunpack.c.l.b16 %v897
          %v1059 = vunpack.c.h.b16 %v897
          %v1060 = vunpack.c.l.b16 %v898
          %v1061 = vunpack.c.h.b16 %v898
          %v1062 = vunpack.c.l.b16 %v899
          %v1063 = vunpack.c.h.b16 %v899
          %v1064 = vunpack.c.l.b16 %v900
          %v1065 = vunpack.c.h.b16 %v900
          %v1066 = vunpack.c.l.b16 %v901
          %v1067 = vunpack.c.h.b16 %v901
          %v1068 = vunpack.c.l.b16 %v902
          %v1069 = vunpack.c.h.b16 %v902
          %v1070 = vunpack.c.l.b16 %v903
          %v1071 = vunpack.c.h.b16 %v903
          %v1072 = vunpack.c.l.b16 %v904
          %v1073 = vunpack.c.h.b16 %v904
          %v1074 = vunpack.c.l.b16 %v905
          %v1075 = vunpack.c.h.b16 %v905
          %v1076 = vunpack.c.l.b16 %v906
          %v1077 = vunpack.c.h.b16 %v906
          %v1078 = vunpack.c.l.b16 %v907
          %v1079 = vunpack.c.h.b16 %v907
          %v1080 = vunpack.c.l.b16 %v908
          %v1081 = vunpack.c.h.b16 %v908
          %v1082 = vunpack.c.l.b16 %v909
          %v1083 = vunpack.c.h.b16 %v909
          %v1084 = vunpack.c.l.b16 %v910
          %v1085 = vunpack.c.h.b16 %v910
          %v1086 = vunpack.c.l.b16 %v911
          %v1087 = vunpack.c.h.b16 %v911
          %v1088 = vunpack.c.l.b16 %v912
          %v1089 = vunpack.c.h.b16 %v912
          %v1090 = vunpack.c.l.b16 %v913
          %v1091 = vunpack.c.h.b16 %v913
          %v1092 = vunpack.c.l.b16 %v914
          %v1093 = vunpack.c.h.b16 %v914
          %v1094 = vunpack.c.l.b16 %v915
          %v1095 = vunpack.c.h.b16 %v915
          %v1096 = vunpack.c.l.b16 %v916
          %v1097 = vunpack.c.h.b16 %v916
          %v1098 = vunpack.c.l.b16 %v917
          %v1099 = vunpack.c.h.b16 %v917
          %v1100 = vunpack.c.l.b16 %v918
          %v1101 = vunpack.c.h.b16 %v918
          %v1102 = vunpack.c.l.b16 %v919
          %v1103 = vunpack.c.h.b16 %v919
          %v1104 = vunpack.c.l.b16 %v920
          %v1105 = vunpack.c.h.b16 %v920
          %v1106 = vunpack.c.l.b16 %v921
          %v1107 = vunpack.c.h.b16 %v921
          %v1108 = vunpack.c.l.b16 %v922
          %v1109 = vunpack.c.h.b16 %v922
          %v1110 = vunpack.c.l.b16 %v923
          %v1111 = vunpack.c.h.b16 %v923
          %v1112 = vunpack.c.l.b16 %v924
          %v1113 = vunpack.c.h.b16 %v924
          %v1114 = vunpack.c.l.b16 %v925
          %v1115 = vunpack.c.h.b16 %v925
          %v1116 = vunpack.c.l.b16 %v926
          %v1117 = vunpack.c.h.b16 %v926
          %v1118 = vunpack.c.l.b16 %v927
          %v1119 = vunpack.c.h.b16 %v927
          %v1120 = vpack.c.b16 %v996, %v992
          %v1121 = vpack.c.b16 %v997, %v993
          %v1122 = vpack.c.b16 %v998, %v994
          %v1123 = vpack.c.b16 %v999, %v995
          %v1124 = vpack.c.b16 %v1004, %v1000
          %v1125 = vpack.c.b16 %v1005, %v1001
          %v1126 = vpack.c.b16 %v1006, %v1002
          %v1127 = vpack.c.b16 %v1007, %v1003
          %v1128 = vpack.c.b16 %v1012, %v1008
          %v1129 = vpack.c.b16 %v1013, %v1009
          %v1130 = vpack.c.b16 %v1014, %v1010
          %v1131 = vpack.c.b16 %v1015, %v1011
          %v1132 = vpack.c.b16 %v1020, %v1016
          %v1133 = vpack.c.b16 %v1021, %v1017
          %v1134 = vpack.c.b16 %v1022, %v1018
          %v1135 = vpack.c.b16 %v1023, %v1019
          %v1136 = vpack.c.b16 %v1028, %v1024
          %v1137 = vpack.c.b16 %v1029, %v1025
          %v1138 = vpack.c.b16 %v1030, %v1026
          %v1139 = vpack.c.b16 %v1031, %v1027
          %v1140 = vpack.c.b16 %v1036, %v1032
          %v1141 = vpack.c.b16 %v1037, %v1033
          %v1142 = vpack.c.b16 %v1038, %v1034
          %v1143 = vpack.c.b16 %v1039, %v1035
          %v1144 = vpack.c.b16 %v1044, %v1040
          %v1145 = vpack.c.b16 %v1045, %v1041
          %v1146 = vpack.c.b16 %v1046, %v1042
          %v1147 = vpack.c.b16 %v1047, %v1043
          %v1148 = vpack.c.b16 %v1052, %v1048
          %v1149 = vpack.c.b16 %v1053, %v1049
          %v1150 = vpack.c.b16 %v1054, %v1050
          %v1151 = vpack.c.b16 %v1055, %v1051
          %v1152 = vpack.c.b16 %v1060, %v1056
          %v1153 = vpack.c.b16 %v1061, %v1057
          %v1154 = vpack.c.b16 %v1062, %v1058
          %v1155 = vpack.c.b16 %v1063, %v1059
          %v1156 = vpack.c.b16 %v1068, %v1064
          %v1157 = vpack.c.b16 %v1069, %v1065
          %v1158 = vpack.c.b16 %v1070, %v1066
          %v1159 = vpack.c.b16 %v1071, %v1067
          %v1160 = vpack.c.b16 %v1076, %v1072
          %v1161 = vpack.c.b16 %v1077, %v1073
          %v1162 = vpack.c.b16 %v1078, %v1074
          %v1163 = vpack.c.b16 %v1079, %v1075
          %v1164 = vpack.c.b16 %v1084, %v1080
          %v1165 = vpack.c.b16 %v1085, %v1081
          %v1166 = vpack.c.b16 %v1086, %v1082
          %v1167 = vpack.c.b16 %v1087, %v1083
          %v1168 = vpack.c.b16 %v1092, %v1088
          %v1169 = vpack.c.b16 %v1093, %v1089
          %v1170 = vpack.c.b16 %v1094, %v1090
          %v1171 = vpack.c.b16 %v1095, %v1091
          %v1172 = vpack.c.b16 %v1100, %v1096
          %v1173 = vpack.c.b16 %v1101, %v1097
          %v1174 = vpack.c.b16 %v1102, %v1098
          %v1175 = vpack.c.b16 %v1103, %v1099
          %v1176 = vpack.c.b16 %v1108, %v1104
          %v1177 = vpack.c.b16 %v1109, %v1105
          %v1178 = vpack.c.b16 %v1110, %v1106
          %v1179 = vpack.c.b16 %v1111, %v1107
          %v1180 = vpack.c.b16 %v1116, %v1112
          %v1181 = vpack.c.b16 %v1117, %v1113
          %v1182 = vpack.c.b16 %v1118, %v1114
          %v1183 = vpack.c.b16 %v1119, %v1115
          %1248 = vmatprep.subr.bf16.mxu0 %v1121
          %1249 = vmatpush1.bf16.msra.mxu0 %v1120
          %1250 = vmatprep.subr.bf16.mxu0 %v1125
          %1251 = vmatpush1.bf16.msra.mxu0 %v1124
          %1252 = vmatprep.subr.bf16.mxu0 %v1129
          %1253 = vmatpush1.bf16.msra.mxu0 %v1128
          %1254 = vmatprep.subr.bf16.mxu0 %v1133
          %1255 = vmatpush1.bf16.msra.mxu0 %v1132
          %1256 = vmatprep.subr.bf16.mxu0 %v1137
          %1257 = vmatpush1.bf16.msra.mxu0 %v1136
          %1258 = vmatprep.subr.bf16.mxu0 %v1141
          %1259 = vmatpush1.bf16.msra.mxu0 %v1140
          %1260 = vmatprep.subr.bf16.mxu0 %v1145
          %1261 = vmatpush1.bf16.msra.mxu0 %v1144
          %1262 = vmatprep.subr.bf16.mxu0 %v1149
          %1263 = vmatpush1.bf16.msra.mxu0 %v1148
          %1264 = vmatprep.subr.bf16.mxu0 %v1153
          %1265 = vmatpush1.bf16.msra.mxu0 %v1152
          %1266 = vmatprep.subr.bf16.mxu0 %v1157
          %1267 = vmatpush1.bf16.msra.mxu0 %v1156
          %1268 = vmatprep.subr.bf16.mxu0 %v1161
          %1269 = vmatpush1.bf16.msra.mxu0 %v1160
          %1270 = vmatprep.subr.bf16.mxu0 %v1165
          %1271 = vmatpush1.bf16.msra.mxu0 %v1164
          %1272 = vmatprep.subr.bf16.mxu0 %v1169
          %1273 = vmatpush1.bf16.msra.mxu0 %v1168
          %1274 = vmatprep.subr.bf16.mxu0 %v1173
          %1275 = vmatpush1.bf16.msra.mxu0 %v1172
          %1276 = vmatprep.subr.bf16.mxu0 %v1177
          %1277 = vmatpush1.bf16.msra.mxu0 %v1176
          %1278 = vmatprep.subr.bf16.mxu0 %v1181
          %1279 = vmatpush1.bf16.msra.mxu0 %v1180
          %1280 = vmatprep.mubr.bf16.mxu0 %v863
          %1281 = vmatmul.mubr.bf16.gmra.mrb[0].mxu0 %v862
          %v1282 = vpop.f32.mrb[0].mxu0
          %v1283 = vadd.f32 0.0, %v1282
          %v1284 = vpop.f32.mrb[0].mxu0
          %v1285 = vadd.f32 0.0, %v1284
          %v1286 = vpop.f32.mrb[0].mxu0
          %v1287 = vadd.f32 0.0, %v1286
          %v1288 = vpop.f32.mrb[0].mxu0
          %v1289 = vadd.f32 0.0, %v1288
          %1290 = vdwg.mxu0
          %1291 = vmatprep.subr.bf16.mxu0 %v1123
          %1292 = vmatpush1.bf16.msra.mxu0 %v1122
          %1293 = vmatprep.subr.bf16.mxu0 %v1127
          %1294 = vmatpush1.bf16.msra.mxu0 %v1126
          %1295 = vmatprep.subr.bf16.mxu0 %v1131
          %1296 = vmatpush1.bf16.msra.mxu0 %v1130
          %1297 = vmatprep.subr.bf16.mxu0 %v1135
          %1298 = vmatpush1.bf16.msra.mxu0 %v1134
          %1299 = vmatprep.subr.bf16.mxu0 %v1139
          %1300 = vmatpush1.bf16.msra.mxu0 %v1138
          %1301 = vmatprep.subr.bf16.mxu0 %v1143
          %1302 = vmatpush1.bf16.msra.mxu0 %v1142
          %1303 = vmatprep.subr.bf16.mxu0 %v1147
          %1304 = vmatpush1.bf16.msra.mxu0 %v1146
          %1305 = vmatprep.subr.bf16.mxu0 %v1151
          %1306 = vmatpush1.bf16.msra.mxu0 %v1150
          %1307 = vmatprep.subr.bf16.mxu0 %v1155
          %1308 = vmatpush1.bf16.msra.mxu0 %v1154
          %1309 = vmatprep.subr.bf16.mxu0 %v1159
          %1310 = vmatpush1.bf16.msra.mxu0 %v1158
          %1311 = vmatprep.subr.bf16.mxu0 %v1163
          %1312 = vmatpush1.bf16.msra.mxu0 %v1162
          %1313 = vmatprep.subr.bf16.mxu0 %v1167
          %1314 = vmatpush1.bf16.msra.mxu0 %v1166
          %1315 = vmatprep.subr.bf16.mxu0 %v1171
          %1316 = vmatpush1.bf16.msra.mxu0 %v1170
          %1317 = vmatprep.subr.bf16.mxu0 %v1175
          %1318 = vmatpush1.bf16.msra.mxu0 %v1174
          %1319 = vmatprep.subr.bf16.mxu0 %v1179
          %1320 = vmatpush1.bf16.msra.mxu0 %v1178
          %1321 = vmatprep.subr.bf16.mxu0 %v1183
          %1322 = vmatpush1.bf16.msra.mxu0 %v1182
          %1323 = vmatprep.mubr.bf16.mxu0 %v863
          %1324 = vmatmul.mubr.bf16.gmra.mrb[0].mxu0 %v862
          %v1325 = vpop.f32.mrb[0].mxu0
          %v1326 = vadd.f32 0.0, %v1325
          %v1327 = vpop.f32.mrb[0].mxu0
          %v1328 = vadd.f32 0.0, %v1327
          %v1329 = vpop.f32.mrb[0].mxu0
          %v1330 = vadd.f32 0.0, %v1329
          %v1331 = vpop.f32.mrb[0].mxu0
          %v1332 = vadd.f32 0.0, %v1331
          %1333 = vdwg.mxu0
          %v1338 = vrot.slane %v1283, 3
          %v1339 = vrot.slane %v1285, 3
          %v1340 = vrot.slane %v1287, 3
          %v1341 = vrot.slane %v1289, 3
          %vm1346 = vcmask 1044480
          %v1347 = vsel %vm1346, 0.0, %v1338
          %v1348 = vsel %vm1346, 0.0, %v1339
          %v1349 = vsel %vm1346, 0.0, %v1340
          %v1350 = vsel %vm1346, 0.0, %v1341
          %v1351 = vsel %vm1346, %v1338, 0.0
          %v1352 = vsel %vm1346, %v1339, 0.0
          %v1353 = vsel %vm1346, %v1340, 0.0
          %v1354 = vsel %vm1346, %v1341, 0.0
          %v1355 = vmul.f32 %v1347, 0.00016747254
          %v1356 = vmul.f32 %v1348, 0.00016747254
          %v1357 = vmul.f32 %v1349, 0.00016747254
          %v1358 = vmul.f32 %v1350, 0.00016747254
          %v1359 = vmul.f32 %v1347, 0.0025251762
          %v1360 = vmul.f32 %v1348, 0.0025251762
          %v1361 = vmul.f32 %v1351, 0.0025251762
          %v1362 = vmul.f32 %v1352, 0.0025251762
          %v1363 = vmul.f32 %v1349, 0.0025251762
          %v1364 = vmul.f32 %v1350, 0.0025251762
          %v1365 = vmul.f32 %v1353, 0.0025251762
          %v1366 = vmul.f32 %v1354, 0.0025251762
          %vm1375 = vcmask 1046528
          %v1376 = vrot.slane %v1359, 1
          %v1377 = vrot.slane %v1361, 1
          %v1378 = vsel %vm1375, %v1376, %v1377
          %v1379 = vrot.slane %v1360, 1
          %v1380 = vrot.slane %v1362, 1
          %v1381 = vsel %vm1375, %v1379, %v1380
          %v1382 = vrot.slane %v1363, 1
          %v1383 = vrot.slane %v1365, 1
          %v1384 = vsel %vm1375, %v1382, %v1383
          %v1385 = vrot.slane %v1364, 1
          %v1386 = vrot.slane %v1366, 1
          %v1387 = vsel %vm1375, %v1385, %v1386
          %v1392 = vadd.f32 %v1355, %v1378
          %v1393 = vadd.f32 %v1356, %v1381
          %v1394 = vadd.f32 %v1357, %v1384
          %v1395 = vadd.f32 %v1358, %v1387
          %v1396 = vmul.f32 %v1347, 0.020742822
          %v1397 = vmul.f32 %v1348, 0.020742822
          %v1398 = vmul.f32 %v1351, 0.020742822
          %v1399 = vmul.f32 %v1352, 0.020742822
          %v1400 = vmul.f32 %v1349, 0.020742822
          %v1401 = vmul.f32 %v1350, 0.020742822
          %v1402 = vmul.f32 %v1353, 0.020742822
          %v1403 = vmul.f32 %v1354, 0.020742822
          %vm1412 = vcmask 1045504
          %v1413 = vrot.slane %v1396, 2
          %v1414 = vrot.slane %v1398, 2
          %v1415 = vsel %vm1412, %v1413, %v1414
          %v1416 = vrot.slane %v1397, 2
          %v1417 = vrot.slane %v1399, 2
          %v1418 = vsel %vm1412, %v1416, %v1417
          %v1419 = vrot.slane %v1400, 2
          %v1420 = vrot.slane %v1402, 2
          %v1421 = vsel %vm1412, %v1419, %v1420
          %v1422 = vrot.slane %v1401, 2
          %v1423 = vrot.slane %v1403, 2
          %v1424 = vsel %vm1412, %v1422, %v1423
          %v1429 = vadd.f32 %v1392, %v1415
          %v1430 = vadd.f32 %v1393, %v1418
          %v1431 = vadd.f32 %v1394, %v1421
          %v1432 = vadd.f32 %v1395, %v1424
          %v1433 = vmul.f32 %v1347, 0.09310824
          %v1434 = vmul.f32 %v1348, 0.09310824
          %v1435 = vmul.f32 %v1351, 0.09310824
          %v1436 = vmul.f32 %v1352, 0.09310824
          %v1437 = vmul.f32 %v1349, 0.09310824
          %v1438 = vmul.f32 %v1350, 0.09310824
          %v1439 = vmul.f32 %v1353, 0.09310824
          %v1440 = vmul.f32 %v1354, 0.09310824
          %v1449 = vrot.slane %v1433, 3
          %v1450 = vrot.slane %v1435, 3
          %v1451 = vsel %vm1346, %v1449, %v1450
          %v1452 = vrot.slane %v1434, 3
          %v1453 = vrot.slane %v1436, 3
          %v1454 = vsel %vm1346, %v1452, %v1453
          %v1455 = vrot.slane %v1437, 3
          %v1456 = vrot.slane %v1439, 3
          %v1457 = vsel %vm1346, %v1455, %v1456
          %v1458 = vrot.slane %v1438, 3
          %v1459 = vrot.slane %v1440, 3
          %v1460 = vsel %vm1346, %v1458, %v1459
          %v1465 = vadd.f32 %v1429, %v1451
          %v1466 = vadd.f32 %v1430, %v1454
          %v1467 = vadd.f32 %v1431, %v1457
          %v1468 = vadd.f32 %v1432, %v1460
          %v1469 = vmul.f32 %v1347, 0.22896034
          %v1470 = vmul.f32 %v1348, 0.22896034
          %v1471 = vmul.f32 %v1351, 0.22896034
          %v1472 = vmul.f32 %v1352, 0.22896034
          %v1473 = vmul.f32 %v1349, 0.22896034
          %v1474 = vmul.f32 %v1350, 0.22896034
          %v1475 = vmul.f32 %v1353, 0.22896034
          %v1476 = vmul.f32 %v1354, 0.22896034
          %vm1485 = vcmask 1043456
          %v1486 = vrot.slane %v1469, 4
          %v1487 = vrot.slane %v1471, 4
          %v1488 = vsel %vm1485, %v1486, %v1487
          %v1489 = vrot.slane %v1470, 4
          %v1490 = vrot.slane %v1472, 4
          %v1491 = vsel %vm1485, %v1489, %v1490
          %v1492 = vrot.slane %v1473, 4
          %v1493 = vrot.slane %v1475, 4
          %v1494 = vsel %vm1485, %v1492, %v1493
          %v1495 = vrot.slane %v1474, 4
          %v1496 = vrot.slane %v1476, 4
          %v1497 = vsel %vm1485, %v1495, %v1496
          %v1502 = vadd.f32 %v1465, %v1488
          %v1503 = vadd.f32 %v1466, %v1491
          %v1504 = vadd.f32 %v1467, %v1494
          %v1505 = vadd.f32 %v1468, %v1497
          %v1506 = vmul.f32 %v1347, 0.3089796
          %v1507 = vmul.f32 %v1348, 0.3089796
          %v1508 = vmul.f32 %v1351, 0.3089796
          %v1509 = vmul.f32 %v1352, 0.3089796
          %v1510 = vmul.f32 %v1349, 0.3089796
          %v1511 = vmul.f32 %v1350, 0.3089796
          %v1512 = vmul.f32 %v1353, 0.3089796
          %v1513 = vmul.f32 %v1354, 0.3089796
          %vm1522 = vcmask 1042432
          %v1523 = vrot.slane %v1506, 5
          %v1524 = vrot.slane %v1508, 5
          %v1525 = vsel %vm1522, %v1523, %v1524
          %v1526 = vrot.slane %v1507, 5
          %v1527 = vrot.slane %v1509, 5
          %v1528 = vsel %vm1522, %v1526, %v1527
          %v1529 = vrot.slane %v1510, 5
          %v1530 = vrot.slane %v1512, 5
          %v1531 = vsel %vm1522, %v1529, %v1530
          %v1532 = vrot.slane %v1511, 5
          %v1533 = vrot.slane %v1513, 5
          %v1534 = vsel %vm1522, %v1532, %v1533
          %v1539 = vadd.f32 %v1502, %v1525
          %v1540 = vadd.f32 %v1503, %v1528
          %v1541 = vadd.f32 %v1504, %v1531
          %v1542 = vadd.f32 %v1505, %v1534
          %vm1543 = vcmask 1041408
          %v1544 = vrot.slane %v1469, 6
          %v1545 = vrot.slane %v1471, 6
          %v1546 = vsel %vm1543, %v1544, %v1545
          %v1547 = vrot.slane %v1470, 6
          %v1548 = vrot.slane %v1472, 6
          %v1549 = vsel %vm1543, %v1547, %v1548
          %v1550 = vrot.slane %v1473, 6
          %v1551 = vrot.slane %v1475, 6
          %v1552 = vsel %vm1543, %v1550, %v1551
          %v1553 = vrot.slane %v1474, 6
          %v1554 = vrot.slane %v1476, 6
          %v1555 = vsel %vm1543, %v1553, %v1554
          %v1560 = vadd.f32 %v1539, %v1546
          %v1561 = vadd.f32 %v1540, %v1549
          %v1562 = vadd.f32 %v1541, %v1552
          %v1563 = vadd.f32 %v1542, %v1555
          %vm1564 = vcmask 1040384
          %v1565 = vrot.slane %v1433, 7
          %v1566 = vrot.slane %v1435, 7
          %v1567 = vsel %vm1564, %v1565, %v1566
          %v1568 = vrot.slane %v1434, 7
          %v1569 = vrot.slane %v1436, 7
          %v1570 = vsel %vm1564, %v1568, %v1569
          %v1571 = vrot.slane %v1437, 7
          %v1572 = vrot.slane %v1439, 7
          %v1573 = vsel %vm1564, %v1571, %v1572
          %v1574 = vrot.slane %v1438, 7
          %v1575 = vrot.slane %v1440, 7
          %v1576 = vsel %vm1564, %v1574, %v1575
          %v1581 = vadd.f32 %v1560, %v1567
          %v1582 = vadd.f32 %v1561, %v1570
          %v1583 = vadd.f32 %v1562, %v1573
          %v1584 = vadd.f32 %v1563, %v1576
          %v1585 = vadd.f32 %v1581, %v1398
          %v1586 = vadd.f32 %v1582, %v1399
          %v1587 = vadd.f32 %v1583, %v1402
          %v1588 = vadd.f32 %v1584, %v1403
          %v1590 = vrot.slane 0.0, 1
          %v1591 = vsel %vm1375, %v1377, %v1590
          %v1592 = vsel %vm1375, %v1380, %v1590
          %v1593 = vsel %vm1375, %v1383, %v1590
          %v1594 = vsel %vm1375, %v1386, %v1590
          %v1599 = vadd.f32 %v1585, %v1591
          %v1600 = vadd.f32 %v1586, %v1592
          %v1601 = vadd.f32 %v1587, %v1593
          %v1602 = vadd.f32 %v1588, %v1594
          %v1603 = vmul.f32 %v1351, 0.00016747254
          %v1604 = vmul.f32 %v1352, 0.00016747254
          %v1605 = vmul.f32 %v1353, 0.00016747254
          %v1606 = vmul.f32 %v1354, 0.00016747254
          %v1611 = vrot.slane %v1603, 2
          %v1612 = vrot.slane 0.0, 2
          %v1613 = vsel %vm1412, %v1611, %v1612
          %v1614 = vrot.slane %v1604, 2
          %v1615 = vsel %vm1412, %v1614, %v1612
          %v1616 = vrot.slane %v1605, 2
          %v1617 = vsel %vm1412, %v1616, %v1612
          %v1618 = vrot.slane %v1606, 2
          %v1619 = vsel %vm1412, %v1618, %v1612
          %v1624 = vadd.f32 %v1599, %v1613
          %v1625 = vadd.f32 %v1600, %v1615
          %v1626 = vadd.f32 %v1601, %v1617
          %v1627 = vadd.f32 %v1602, %v1619
          %v1632 = vrot.slane %v1326, 3
          %v1633 = vrot.slane %v1328, 3
          %v1634 = vrot.slane %v1330, 3
          %v1635 = vrot.slane %v1332, 3
          %v1640 = vsel %vm1346, 0.0, %v1632
          %v1641 = vsel %vm1346, 0.0, %v1633
          %v1642 = vsel %vm1346, 0.0, %v1634
          %v1643 = vsel %vm1346, 0.0, %v1635
          %v1644 = vsel %vm1346, %v1632, 0.0
          %v1645 = vsel %vm1346, %v1633, 0.0
          %v1646 = vsel %vm1346, %v1634, 0.0
          %v1647 = vsel %vm1346, %v1635, 0.0
          %v1648 = vmul.f32 %v1640, 0.00016747254
          %v1649 = vmul.f32 %v1641, 0.00016747254
          %v1650 = vmul.f32 %v1642, 0.00016747254
          %v1651 = vmul.f32 %v1643, 0.00016747254
          %v1652 = vmul.f32 %v1640, 0.0025251762
          %v1653 = vmul.f32 %v1641, 0.0025251762
          %v1654 = vmul.f32 %v1644, 0.0025251762
          %v1655 = vmul.f32 %v1645, 0.0025251762
          %v1656 = vmul.f32 %v1642, 0.0025251762
          %v1657 = vmul.f32 %v1643, 0.0025251762
          %v1658 = vmul.f32 %v1646, 0.0025251762
          %v1659 = vmul.f32 %v1647, 0.0025251762
          %v1668 = vrot.slane %v1652, 1
          %v1669 = vrot.slane %v1654, 1
          %v1670 = vsel %vm1375, %v1668, %v1669
          %v1671 = vrot.slane %v1653, 1
          %v1672 = vrot.slane %v1655, 1
          %v1673 = vsel %vm1375, %v1671, %v1672
          %v1674 = vrot.slane %v1656, 1
          %v1675 = vrot.slane %v1658, 1
          %v1676 = vsel %vm1375, %v1674, %v1675
          %v1677 = vrot.slane %v1657, 1
          %v1678 = vrot.slane %v1659, 1
          %v1679 = vsel %vm1375, %v1677, %v1678
          %v1684 = vadd.f32 %v1648, %v1670
          %v1685 = vadd.f32 %v1649, %v1673
          %v1686 = vadd.f32 %v1650, %v1676
          %v1687 = vadd.f32 %v1651, %v1679
          %v1688 = vmul.f32 %v1640, 0.020742822
          %v1689 = vmul.f32 %v1641, 0.020742822
          %v1690 = vmul.f32 %v1644, 0.020742822
          %v1691 = vmul.f32 %v1645, 0.020742822
          %v1692 = vmul.f32 %v1642, 0.020742822
          %v1693 = vmul.f32 %v1643, 0.020742822
          %v1694 = vmul.f32 %v1646, 0.020742822
          %v1695 = vmul.f32 %v1647, 0.020742822
          %v1704 = vrot.slane %v1688, 2
          %v1705 = vrot.slane %v1690, 2
          %v1706 = vsel %vm1412, %v1704, %v1705
          %v1707 = vrot.slane %v1689, 2
          %v1708 = vrot.slane %v1691, 2
          %v1709 = vsel %vm1412, %v1707, %v1708
          %v1710 = vrot.slane %v1692, 2
          %v1711 = vrot.slane %v1694, 2
          %v1712 = vsel %vm1412, %v1710, %v1711
          %v1713 = vrot.slane %v1693, 2
          %v1714 = vrot.slane %v1695, 2
          %v1715 = vsel %vm1412, %v1713, %v1714
          %v1720 = vadd.f32 %v1684, %v1706
          %v1721 = vadd.f32 %v1685, %v1709
          %v1722 = vadd.f32 %v1686, %v1712
          %v1723 = vadd.f32 %v1687, %v1715
          %v1724 = vmul.f32 %v1640, 0.09310824
          %v1725 = vmul.f32 %v1641, 0.09310824
          %v1726 = vmul.f32 %v1644, 0.09310824
          %v1727 = vmul.f32 %v1645, 0.09310824
          %v1728 = vmul.f32 %v1642, 0.09310824
          %v1729 = vmul.f32 %v1643, 0.09310824
          %v1730 = vmul.f32 %v1646, 0.09310824
          %v1731 = vmul.f32 %v1647, 0.09310824
          %v1740 = vrot.slane %v1724, 3
          %v1741 = vrot.slane %v1726, 3
          %v1742 = vsel %vm1346, %v1740, %v1741
          %v1743 = vrot.slane %v1725, 3
          %v1744 = vrot.slane %v1727, 3
          %v1745 = vsel %vm1346, %v1743, %v1744
          %v1746 = vrot.slane %v1728, 3
          %v1747 = vrot.slane %v1730, 3
          %v1748 = vsel %vm1346, %v1746, %v1747
          %v1749 = vrot.slane %v1729, 3
          %v1750 = vrot.slane %v1731, 3
          %v1751 = vsel %vm1346, %v1749, %v1750
          %v1756 = vadd.f32 %v1720, %v1742
          %v1757 = vadd.f32 %v1721, %v1745
          %v1758 = vadd.f32 %v1722, %v1748
          %v1759 = vadd.f32 %v1723, %v1751
          %v1760 = vmul.f32 %v1640, 0.22896034
          %v1761 = vmul.f32 %v1641, 0.22896034
          %v1762 = vmul.f32 %v1644, 0.22896034
          %v1763 = vmul.f32 %v1645, 0.22896034
          %v1764 = vmul.f32 %v1642, 0.22896034
          %v1765 = vmul.f32 %v1643, 0.22896034
          %v1766 = vmul.f32 %v1646, 0.22896034
          %v1767 = vmul.f32 %v1647, 0.22896034
          %v1776 = vrot.slane %v1760, 4
          %v1777 = vrot.slane %v1762, 4
          %v1778 = vsel %vm1485, %v1776, %v1777
          %v1779 = vrot.slane %v1761, 4
          %v1780 = vrot.slane %v1763, 4
          %v1781 = vsel %vm1485, %v1779, %v1780
          %v1782 = vrot.slane %v1764, 4
          %v1783 = vrot.slane %v1766, 4
          %v1784 = vsel %vm1485, %v1782, %v1783
          %v1785 = vrot.slane %v1765, 4
          %v1786 = vrot.slane %v1767, 4
          %v1787 = vsel %vm1485, %v1785, %v1786
          %v1792 = vadd.f32 %v1756, %v1778
          %v1793 = vadd.f32 %v1757, %v1781
          %v1794 = vadd.f32 %v1758, %v1784
          %v1795 = vadd.f32 %v1759, %v1787
          %v1796 = vmul.f32 %v1640, 0.3089796
          %v1797 = vmul.f32 %v1641, 0.3089796
          %v1798 = vmul.f32 %v1644, 0.3089796
          %v1799 = vmul.f32 %v1645, 0.3089796
          %v1800 = vmul.f32 %v1642, 0.3089796
          %v1801 = vmul.f32 %v1643, 0.3089796
          %v1802 = vmul.f32 %v1646, 0.3089796
          %v1803 = vmul.f32 %v1647, 0.3089796
          %v1812 = vrot.slane %v1796, 5
          %v1813 = vrot.slane %v1798, 5
          %v1814 = vsel %vm1522, %v1812, %v1813
          %v1815 = vrot.slane %v1797, 5
          %v1816 = vrot.slane %v1799, 5
          %v1817 = vsel %vm1522, %v1815, %v1816
          %v1818 = vrot.slane %v1800, 5
          %v1819 = vrot.slane %v1802, 5
          %v1820 = vsel %vm1522, %v1818, %v1819
          %v1821 = vrot.slane %v1801, 5
          %v1822 = vrot.slane %v1803, 5
          %v1823 = vsel %vm1522, %v1821, %v1822
          %v1828 = vadd.f32 %v1792, %v1814
          %v1829 = vadd.f32 %v1793, %v1817
          %v1830 = vadd.f32 %v1794, %v1820
          %v1831 = vadd.f32 %v1795, %v1823
          %v1832 = vrot.slane %v1760, 6
          %v1833 = vrot.slane %v1762, 6
          %v1834 = vsel %vm1543, %v1832, %v1833
          %v1835 = vrot.slane %v1761, 6
          %v1836 = vrot.slane %v1763, 6
          %v1837 = vsel %vm1543, %v1835, %v1836
          %v1838 = vrot.slane %v1764, 6
          %v1839 = vrot.slane %v1766, 6
          %v1840 = vsel %vm1543, %v1838, %v1839
          %v1841 = vrot.slane %v1765, 6
          %v1842 = vrot.slane %v1767, 6
          %v1843 = vsel %vm1543, %v1841, %v1842
          %v1848 = vadd.f32 %v1828, %v1834
          %v1849 = vadd.f32 %v1829, %v1837
          %v1850 = vadd.f32 %v1830, %v1840
          %v1851 = vadd.f32 %v1831, %v1843
          %v1852 = vrot.slane %v1724, 7
          %v1853 = vrot.slane %v1726, 7
          %v1854 = vsel %vm1564, %v1852, %v1853
          %v1855 = vrot.slane %v1725, 7
          %v1856 = vrot.slane %v1727, 7
          %v1857 = vsel %vm1564, %v1855, %v1856
          %v1858 = vrot.slane %v1728, 7
          %v1859 = vrot.slane %v1730, 7
          %v1860 = vsel %vm1564, %v1858, %v1859
          %v1861 = vrot.slane %v1729, 7
          %v1862 = vrot.slane %v1731, 7
          %v1863 = vsel %vm1564, %v1861, %v1862
          %v1868 = vadd.f32 %v1848, %v1854
          %v1869 = vadd.f32 %v1849, %v1857
          %v1870 = vadd.f32 %v1850, %v1860
          %v1871 = vadd.f32 %v1851, %v1863
          %v1872 = vadd.f32 %v1868, %v1690
          %v1873 = vadd.f32 %v1869, %v1691
          %v1874 = vadd.f32 %v1870, %v1694
          %v1875 = vadd.f32 %v1871, %v1695
          %v1876 = vsel %vm1375, %v1669, %v1590
          %v1877 = vsel %vm1375, %v1672, %v1590
          %v1878 = vsel %vm1375, %v1675, %v1590
          %v1879 = vsel %vm1375, %v1678, %v1590
          %v1884 = vadd.f32 %v1872, %v1876
          %v1885 = vadd.f32 %v1873, %v1877
          %v1886 = vadd.f32 %v1874, %v1878
          %v1887 = vadd.f32 %v1875, %v1879
          %v1888 = vmul.f32 %v1644, 0.00016747254
          %v1889 = vmul.f32 %v1645, 0.00016747254
          %v1890 = vmul.f32 %v1646, 0.00016747254
          %v1891 = vmul.f32 %v1647, 0.00016747254
          %v1896 = vrot.slane %v1888, 2
          %v1897 = vsel %vm1412, %v1896, %v1612
          %v1898 = vrot.slane %v1889, 2
          %v1899 = vsel %vm1412, %v1898, %v1612
          %v1900 = vrot.slane %v1890, 2
          %v1901 = vsel %vm1412, %v1900, %v1612
          %v1902 = vrot.slane %v1891, 2
          %v1903 = vsel %vm1412, %v1902, %v1612
          %v1908 = vadd.f32 %v1884, %v1897
          %v1909 = vadd.f32 %v1885, %v1899
          %v1910 = vadd.f32 %v1886, %v1901
          %v1911 = vadd.f32 %v1887, %v1903
          %v1916 = vrot.slane %v1908, 4
          %v1917 = vrot.slane %v1909, 4
          %v1918 = vrot.slane %v1910, 4
          %v1919 = vrot.slane %v1911, 4
          %v1924 = vsel %vm1485, 0.0, %v1916
          %v1925 = vsel %vm1485, 0.0, %v1917
          %v1926 = vsel %vm1485, 0.0, %v1918
          %v1927 = vsel %vm1485, 0.0, %v1919
          %v1928 = vsel %vm1485, %v1916, 0.0
          %v1929 = vsel %vm1485, %v1917, 0.0
          %v1930 = vsel %vm1485, %v1918, 0.0
          %v1931 = vsel %vm1485, %v1919, 0.0
          %v1932 = vmul.f32 %v1924, 7.126187e-05
          %v1933 = vmul.f32 %v1925, 7.126187e-05
          %v1934 = vmul.f32 %v1926, 7.126187e-05
          %v1935 = vmul.f32 %v1927, 7.126187e-05
          %v1936 = vmul.f32 %v1924, 0.0032349797
          %v1937 = vmul.f32 %v1925, 0.0032349797
          %v1938 = vmul.f32 %v1928, 0.0032349797
          %v1939 = vmul.f32 %v1929, 0.0032349797
          %v1940 = vmul.f32 %v1926, 0.0032349797
          %v1941 = vmul.f32 %v1927, 0.0032349797
          %v1942 = vmul.f32 %v1930, 0.0032349797
          %v1943 = vmul.f32 %v1931, 0.0032349797
          %v1952 = vrot.slane %v1936, 1
          %v1953 = vrot.slane %v1938, 1
          %v1954 = vsel %vm1375, %v1952, %v1953
          %v1955 = vrot.slane %v1937, 1
          %v1956 = vrot.slane %v1939, 1
          %v1957 = vsel %vm1375, %v1955, %v1956
          %v1958 = vrot.slane %v1940, 1
          %v1959 = vrot.slane %v1942, 1
          %v1960 = vsel %vm1375, %v1958, %v1959
          %v1961 = vrot.slane %v1941, 1
          %v1962 = vrot.slane %v1943, 1
          %v1963 = vsel %vm1375, %v1961, %v1962
          %v1968 = vadd.f32 %v1932, %v1954
          %v1969 = vadd.f32 %v1933, %v1957
          %v1970 = vadd.f32 %v1934, %v1960
          %v1971 = vadd.f32 %v1935, %v1963
          %v1972 = vmul.f32 %v1924, 0.04830506
          %v1973 = vmul.f32 %v1925, 0.04830506
          %v1974 = vmul.f32 %v1928, 0.04830506
          %v1975 = vmul.f32 %v1929, 0.04830506
          %v1976 = vmul.f32 %v1926, 0.04830506
          %v1977 = vmul.f32 %v1927, 0.04830506
          %v1978 = vmul.f32 %v1930, 0.04830506
          %v1979 = vmul.f32 %v1931, 0.04830506
          %v1988 = vrot.slane %v1972, 2
          %v1989 = vrot.slane %v1974, 2
          %v1990 = vsel %vm1412, %v1988, %v1989
          %v1991 = vrot.slane %v1973, 2
          %v1992 = vrot.slane %v1975, 2
          %v1993 = vsel %vm1412, %v1991, %v1992
          %v1994 = vrot.slane %v1976, 2
          %v1995 = vrot.slane %v1978, 2
          %v1996 = vsel %vm1412, %v1994, %v1995
          %v1997 = vrot.slane %v1977, 2
          %v1998 = vrot.slane %v1979, 2
          %v1999 = vsel %vm1412, %v1997, %v1998
          %v2004 = vadd.f32 %v1968, %v1990
          %v2005 = vadd.f32 %v1969, %v1993
          %v2006 = vadd.f32 %v1970, %v1996
          %v2007 = vadd.f32 %v1971, %v1999
          %v2008 = vmul.f32 %v1924, 0.24190462
          %v2009 = vmul.f32 %v1925, 0.24190462
          %v2010 = vmul.f32 %v1928, 0.24190462
          %v2011 = vmul.f32 %v1929, 0.24190462
          %v2012 = vmul.f32 %v1926, 0.24190462
          %v2013 = vmul.f32 %v1927, 0.24190462
          %v2014 = vmul.f32 %v1930, 0.24190462
          %v2015 = vmul.f32 %v1931, 0.24190462
          %v2024 = vrot.slane %v2008, 3
          %v2025 = vrot.slane %v2010, 3
          %v2026 = vsel %vm1346, %v2024, %v2025
          %v2027 = vrot.slane %v2009, 3
          %v2028 = vrot.slane %v2011, 3
          %v2029 = vsel %vm1346, %v2027, %v2028
          %v2030 = vrot.slane %v2012, 3
          %v2031 = vrot.slane %v2014, 3
          %v2032 = vsel %vm1346, %v2030, %v2031
          %v2033 = vrot.slane %v2013, 3
          %v2034 = vrot.slane %v2015, 3
          %v2035 = vsel %vm1346, %v2033, %v2034
          %v2040 = vadd.f32 %v2004, %v2026
          %v2041 = vadd.f32 %v2005, %v2029
          %v2042 = vadd.f32 %v2006, %v2032
          %v2043 = vadd.f32 %v2007, %v2035
          %v2044 = vmul.f32 %v1924, 0.41296715
          %v2045 = vmul.f32 %v1925, 0.41296715
          %v2046 = vmul.f32 %v1928, 0.41296715
          %v2047 = vmul.f32 %v1929, 0.41296715
          %v2048 = vmul.f32 %v1926, 0.41296715
          %v2049 = vmul.f32 %v1927, 0.41296715
          %v2050 = vmul.f32 %v1930, 0.41296715
          %v2051 = vmul.f32 %v1931, 0.41296715
          %v2060 = vrot.slane %v2044, 4
          %v2061 = vrot.slane %v2046, 4
          %v2062 = vsel %vm1485, %v2060, %v2061
          %v2063 = vrot.slane %v2045, 4
          %v2064 = vrot.slane %v2047, 4
          %v2065 = vsel %vm1485, %v2063, %v2064
          %v2066 = vrot.slane %v2048, 4
          %v2067 = vrot.slane %v2050, 4
          %v2068 = vsel %vm1485, %v2066, %v2067
          %v2069 = vrot.slane %v2049, 4
          %v2070 = vrot.slane %v2051, 4
          %v2071 = vsel %vm1485, %v2069, %v2070
          %v2076 = vadd.f32 %v2040, %v2062
          %v2077 = vadd.f32 %v2041, %v2065
          %v2078 = vadd.f32 %v2042, %v2068
          %v2079 = vadd.f32 %v2043, %v2071
          %v2080 = vrot.slane %v2008, 5
          %v2081 = vrot.slane %v2010, 5
          %v2082 = vsel %vm1522, %v2080, %v2081
          %v2083 = vrot.slane %v2009, 5
          %v2084 = vrot.slane %v2011, 5
          %v2085 = vsel %vm1522, %v2083, %v2084
          %v2086 = vrot.slane %v2012, 5
          %v2087 = vrot.slane %v2014, 5
          %v2088 = vsel %vm1522, %v2086, %v2087
          %v2089 = vrot.slane %v2013, 5
          %v2090 = vrot.slane %v2015, 5
          %v2091 = vsel %vm1522, %v2089, %v2090
          %v2096 = vadd.f32 %v2076, %v2082
          %v2097 = vadd.f32 %v2077, %v2085
          %v2098 = vadd.f32 %v2078, %v2088
          %v2099 = vadd.f32 %v2079, %v2091
          %v2100 = vrot.slane %v1972, 6
          %v2101 = vrot.slane %v1974, 6
          %v2102 = vsel %vm1543, %v2100, %v2101
          %v2103 = vrot.slane %v1973, 6
          %v2104 = vrot.slane %v1975, 6
          %v2105 = vsel %vm1543, %v2103, %v2104
          %v2106 = vrot.slane %v1976, 6
          %v2107 = vrot.slane %v1978, 6
          %v2108 = vsel %vm1543, %v2106, %v2107
          %v2109 = vrot.slane %v1977, 6
          %v2110 = vrot.slane %v1979, 6
          %v2111 = vsel %vm1543, %v2109, %v2110
          %v2116 = vadd.f32 %v2096, %v2102
          %v2117 = vadd.f32 %v2097, %v2105
          %v2118 = vadd.f32 %v2098, %v2108
          %v2119 = vadd.f32 %v2099, %v2111
          %v2120 = vrot.slane %v1936, 7
          %v2121 = vrot.slane %v1938, 7
          %v2122 = vsel %vm1564, %v2120, %v2121
          %v2123 = vrot.slane %v1937, 7
          %v2124 = vrot.slane %v1939, 7
          %v2125 = vsel %vm1564, %v2123, %v2124
          %v2126 = vrot.slane %v1940, 7
          %v2127 = vrot.slane %v1942, 7
          %v2128 = vsel %vm1564, %v2126, %v2127
          %v2129 = vrot.slane %v1941, 7
          %v2130 = vrot.slane %v1943, 7
          %v2131 = vsel %vm1564, %v2129, %v2130
          %v2136 = vadd.f32 %v2116, %v2122
          %v2137 = vadd.f32 %v2117, %v2125
          %v2138 = vadd.f32 %v2118, %v2128
          %v2139 = vadd.f32 %v2119, %v2131
          %v2140 = vmul.f32 %v1928, 7.126187e-05
          %v2141 = vmul.f32 %v1929, 7.126187e-05
          %v2142 = vmul.f32 %v1930, 7.126187e-05
          %v2143 = vmul.f32 %v1931, 7.126187e-05
          %v2144 = vadd.f32 %v2136, %v2140
          %v2145 = vadd.f32 %v2137, %v2141
          %v2146 = vadd.f32 %v2138, %v2142
          %v2147 = vadd.f32 %v2139, %v2143
          %v2148 = vmul.f32 %v1624, 31.0
          %v2149 = vmul.f32 %v1625, 31.0
          %v2150 = vmul.f32 %v1626, 31.0
          %v2151 = vmul.f32 %v1627, 31.0
          %v2152 = vmul.f32 %v2144, 30.0
          %v2153 = vmul.f32 %v2145, 30.0
          %v2154 = vmul.f32 %v2146, 30.0
          %v2155 = vmul.f32 %v2147, 30.0
          %v2156 = vsub.f32 %v2148, %v2152
          %v2157 = vsub.f32 %v2149, %v2153
          %v2158 = vsub.f32 %v2150, %v2154
          %v2159 = vsub.f32 %v2151, %v2155
          %2160 = vst [vmem:[%s181] sm:$0xff] %v2156
          %2161 = vst [vmem:[%s181 + $0x8] sm:$0xff] %v2157
          %2162 = vst [vmem:[%s181 + $0x10] sm:$0xff] %v2158
          %2163 = vst [vmem:[%s181 + $0x18] sm:$0xff] %v2159
        $region44: #{tpu_custom_call.1} parent=27 // pred_fallthru
          _
        %s2164 = sadd.s32 %s190, 2
        %s2165 = sld [smem:[#allocation3 + %s2164]]
        %p2166 = scmp.eq.s32.totalorder %s2165, 1
        // Predicated region
        $region45: #{tpu_custom_call.1} parent=27 // pred_check
          %p2167 = pneg %p2166
        $region46: #{tpu_custom_call.1} parent=27 // pred_check_branch
          %2169 = sbr.rel (%p2167) target = $region48
        $region47: #{tpu_custom_call.1} parent=27 // pred_region
          %v2170 = vld [vmem:[%s181] sm:$0xff]
          %v2171 = vld [vmem:[%s181 + $0x8] sm:$0xff]
          %v2172 = vld [vmem:[%s181 + $0x10] sm:$0xff]
          %v2173 = vld [vmem:[%s181 + $0x18] sm:$0xff]
          %v2174 = vmin.f32 %v2170, %v2171
          %v2175 = vmin.f32 %v2172, %v2173
          %v2176 = vmin.f32 %v2174, %v2175
          %2177 = vmin.xlane.f32.xlu0 %v2176
          %v2178 = vpop.xlane.xlu0 %2177
          %v2179 = vrot.slane %v2178, 4
          %v2180 = vmin.f32 %v2178, %v2179
          %v2181 = vrot.slane %v2180, 2
          %v2182 = vmin.f32 %v2180, %v2181
          %v2183 = vrot.slane %v2182, 1
          %v2184 = vmin.f32 %v2182, %v2183
          %s2185 = vtos %v2184
          %v2186 = vstv %s2185
          %v2187 = vmax.f32 %v2170, %v2171
          %v2188 = vmax.f32 %v2172, %v2173
          %v2189 = vmax.f32 %v2187, %v2188
          %2190 = vmax.xlane.f32.xlu0 %v2189
          %v2191 = vpop.xlane.xlu0 %2190
          %v2192 = vrot.slane %v2191, 4
          %v2193 = vmax.f32 %v2191, %v2192
          %v2194 = vrot.slane %v2193, 2
          %v2195 = vmax.f32 %v2193, %v2194
          %v2196 = vrot.slane %v2195, 1
          %v2197 = vmax.f32 %v2195, %v2196
          %s2198 = vtos %v2197
          %v2199 = vstv %s2198
          %v2200 = vsub.f32 %v2199, %v2186
          %v2201 = vsub.f32 %v2170, %v2186
          %v2202 = vsub.f32 %v2171, %v2186
          %v2203 = vsub.f32 %v2172, %v2186
          %v2204 = vsub.f32 %v2173, %v2186
          %v2205 = vadd.f32 %v2200, 1e-07
          %v2206 = vrcp.pop %v2205
          %v2207 = vmul.f32 %v2201, %v2206
          %v2208 = vmul.f32 %v2202, %v2206
          %v2209 = vmul.f32 %v2203, %v2206
          %v2210 = vmul.f32 %v2204, %v2206
          %vm2211 = vcmp.gt.f32.partialorder %v2207, 0.0
          %vm2212 = vcmp.gt.f32.partialorder %v2208, 0.0
          %vm2213 = vcmp.gt.f32.partialorder %v2209, 0.0
          %vm2214 = vcmp.gt.f32.partialorder %v2210, 0.0
          %v2215 = vmax.f32 %v2207, 1e-30
          %v2216 = vmax.f32 %v2208, 1e-30
          %v2217 = vmax.f32 %v2209, 1e-30
          %v2218 = vmax.f32 %v2210, 1e-30
          %v2219 = vlog2.pop %v2215
          %v2220 = vmul.f32 %v2219, 0.6931472
          %v2221 = vlog2.pop %v2216
          %v2222 = vmul.f32 %v2221, 0.6931472
          %v2223 = vlog2.pop %v2217
          %v2224 = vmul.f32 %v2223, 0.6931472
          %v2225 = vlog2.pop %v2218
          %v2226 = vmul.f32 %v2225, 0.6931472
          %v2227 = vmul.f32 %v2220, 1.0845835
          %v2228 = vmul.f32 %v2222, 1.0845835
          %v2229 = vmul.f32 %v2224, 1.0845835
          %v2230 = vmul.f32 %v2226, 1.0845835
          %v2231 = vmul.f32 %v2227, 1.442695
          %v2232 = vpow.pop %v2231
          %v2233 = vmul.f32 %v2228, 1.442695
          %v2234 = vpow.pop %v2233
          %v2235 = vmul.f32 %v2229, 1.442695
          %v2236 = vpow.pop %v2235
          %v2237 = vmul.f32 %v2230, 1.442695
          %v2238 = vpow.pop %v2237
          %v2239 = vsel %vm2211, %v2232, 0.0
          %v2240 = vsel %vm2212, %v2234, 0.0
          %v2241 = vsel %vm2213, %v2236, 0.0
          %v2242 = vsel %vm2214, %v2238, 0.0
          %v2243 = vmul.f32 %v2239, %v2200
          %v2244 = vmul.f32 %v2240, %v2200
          %v2245 = vmul.f32 %v2241, %v2200
          %v2246 = vmul.f32 %v2242, %v2200
          %v2247 = vadd.f32 %v2243, %v2186
          %v2248 = vadd.f32 %v2244, %v2186
          %v2249 = vadd.f32 %v2245, %v2186
          %v2250 = vadd.f32 %v2246, %v2186
          %2251 = vst [vmem:[%s181] sm:$0xff] %v2247
          %2252 = vst [vmem:[%s181 + $0x8] sm:$0xff] %v2248
          %2253 = vst [vmem:[%s181 + $0x10] sm:$0xff] %v2249
          %2254 = vst [vmem:[%s181 + $0x18] sm:$0xff] %v2250
        $region48: #{tpu_custom_call.1} parent=27 // pred_fallthru
          _
        %s2255 = sand.u32 %s80, 1
        %s2256 = scalar_lea.sflag [#allocation6], %s2255
        %s2257 = sand.u32 %s80, 1
        %s2258 = smul.addr %s2257, 32
        %s2259 = scalar_lea.vmem [#allocation9], %s2258
        // Predicated region
        $region49: #{tpu_custom_call.1} parent=27 // pred_check
          %p2260 = pneg %p90
        $region50: #{tpu_custom_call.1} parent=27 // pred_check_branch
          %2262 = sbr.rel (%p2260) target = $region52
        $region51: #{tpu_custom_call.1} parent=27 // pred_region
          %s2264 = ssub.s32 512, 512
          %2265 = vsyncadd %s2256, %s2264
          %s2266 = smul.addr %s25, 4
          %s2267 = smul.addr %s2266, 128
          %s2268 = scalar_lea.hbm %s3, %s2267
          %s2269 = sshll.u32 %s2259, 4
          %s2270 = int_to_ptr.vmem [resolvable:$true] %s2269
          %2275 = dma.vmem_to_hbm [thread:$0]  %s2270, 512, %s2268, %s2256, 256, 256, 16
        $region52: #{tpu_custom_call.1} parent=27 // pred_fallthru
          _
      $region28: #{tpu_custom_call.1} parent=5 // pred_fallthru
        _
      %p2276 = scmp.le.s32.totalorder 2, %s20
      // Predicated region
      $region53: #{tpu_custom_call.1} parent=5 // pred_check
        %p2277 = pneg %p2276
      $region54: #{tpu_custom_call.1} parent=5 // pred_check_branch
        %2279 = sbr.rel (%p2277) target = $region56
      $region55: #{tpu_custom_call.1} parent=5 // pred_region
        %s2280 = ssub.s32 %s20, 2
        // Predicated region
        $region57: #{tpu_custom_call.1} parent=55 // pred_check
          %p2281 = pneg %p96
        $region58: #{tpu_custom_call.1} parent=55 // pred_check_branch
          %2283 = sbr.rel (%p2281) target = $region60
        $region59: #{tpu_custom_call.1} parent=55 // pred_region
          %s2284 = sand.u32 %s81, 1
          %s2285 = scalar_lea.sflag [#allocation6], %s2284
          %s2286 = sand.u32 %s81, 1
          %s2287 = smul.addr %s2286, 32
          %s2288 = scalar_lea.vmem [#allocation9], %s2287
          %2289 = dma.done %s2285, 512
        $region60: #{tpu_custom_call.1} parent=55 // pred_fallthru
          _
      $region56: #{tpu_custom_call.1} parent=5 // pred_fallthru
        _
    $region6: #{tpu_custom_call.1} parent=1 // loop_footer
      %s24 = sadd.s32 1, %s20
    $region7: #{tpu_custom_call.1} parent=1 // loop_footer_branch
      %19 = sbr.rel target = $region3
    $region8: #{tpu_custom_call.1} parent=1 // loop_exit
      _
    %2290 = vsyncpa [#allocation5], 1
    %s2291 = scalar_lea.sflag [#allocation5], 1
    %2292 = vsyncpa %s2291, 1
    %2293 = vsyncpa [#allocation8], 1
    %2294 = vsyncpa [#allocation6], 1
    %s2295 = scalar_lea.sflag [#allocation6], 1
    %2296 = vsyncpa %s2295, 1

</llo_original>
